<compile_context>
chip_gen: v7x
topology: tpu7x:2x2x1
jax: 0.10.0
libtpu: 0.0.40
codegen_flags: <defaults>
</compile_context>

<pallas_src>
import math

import jax
import jax.numpy as jnp
from jax.experimental import pallas as pl
from jax.experimental.pallas import tpu as pltpu


def autorec_kernel(x_ref, w1_ref, b1_ref, w2_ref, b2_ref, o_ref):
    # x_ref:  (TB, num_items)        f32
    # w1_ref: (num_items, num_hidden) bf16 (grid-invariant)
    # b1_ref: (1, num_hidden)         f32
    # w2_ref: (num_hidden, num_items) bf16 (grid-invariant)
    # b2_ref: (1, num_items)          f32
    # o_ref:  (TB, num_items)         f32

    # encoder: Linear + ReLU (+ Dropout, identity at eval)
    x = x_ref[...].astype(jnp.bfloat16)                      # bf16 MXU operand
    h = jnp.dot(x, w1_ref[...], preferred_element_type=jnp.float32)
    h = jnp.maximum(h + b1_ref[...], 0.0)                    # f32 bias + ReLU

    # decoder: Linear + ReLU
    y = jnp.dot(h.astype(jnp.bfloat16), w2_ref[...],
                preferred_element_type=jnp.float32)
    y = jnp.maximum(y + b2_ref[...], 0.0)
    o_ref[...] = y.astype(o_ref.dtype)


def autorec_forward(x, w1, b1, w2, b2, *, tile_batch=128):
    """y = relu(relu(x @ W1 + b1) @ W2 + b2); weights stored (in, out)."""
    B, num_items = x.shape
    num_hidden = w1.shape[1]

    # Batch tile: big enough to fill the MXU M dimension, clamped to the
    # (padded) batch size and kept a multiple of 8 sublanes.
    tile_batch = max(8, min(int(tile_batch), pl.cdiv(B, 8) * 8))
    b_pad = pl.cdiv(B, tile_batch) * tile_batch
    x_in = jnp.pad(x, ((0, b_pad - B), (0, 0))) if b_pad != B else x

    # bf16 matmul operands; biases stay f32, accumulation is f32.
    w1b = w1.astype(jnp.bfloat16)
    w2b = w2.astype(jnp.bfloat16)
    b1f = jnp.asarray(b1, jnp.float32).reshape(1, num_hidden)
    b2f = jnp.asarray(b2, jnp.float32).reshape(1, num_items)

    grid = (b_pad // tile_batch,)

    # Advisory cost hint for XLA's scheduler (2 matmuls of B x items x hidden).
    flops = 2 * 2 * b_pad * num_items * num_hidden
    bytes_accessed = (
        x_in.size * x_in.dtype.itemsize
        + w1b.size * 2 + w2b.size * 2
        + b1f.size * 4 + b2f.size * 4
        + b_pad * num_items * x.dtype.itemsize
    )
    cost = pl.CostEstimate(flops=flops, transcendentals=0,
                           bytes_accessed=bytes_accessed)

    # VMEM budget: double-buffered x/out tiles + resident weights/biases + slack.
    tile_bytes = tile_batch * num_items * x.dtype.itemsize
    weight_bytes = w1b.size * 2 + w2b.size * 2 + b1f.size * 4 + b2f.size * 4
    vmem_needed = 2 * (2 * tile_bytes) + 2 * weight_bytes + (2 << 20)
    vmem_limit = int(min(100 * 1024 * 1024,
                         max(32 * 1024 * 1024, 2 * vmem_needed)))

    out = pl.pallas_call(
        autorec_kernel,
        out_shape=jax.ShapeDtypeStruct((b_pad, num_items), x.dtype),
        grid_spec=pltpu.PrefetchScalarGridSpec(
            num_scalar_prefetch=0,
            grid=grid,
            in_specs=[
                pl.BlockSpec((tile_batch, num_items), lambda i: (i, 0)),  # x tile
                # Grid-invariant weights/biases: constant index_map, so the
                # pipeline skips re-DMA across batch tiles.
                # TODO(synk): at MovieLens-scale num_items (~17k), add a K-tiling
                # grid axis over num_items for the encoder (f32 accumulator +
                # pl.when init/finalize) and N-tiling for the decoder output so
                # full W1/W2 need not be VMEM-resident on v7x (64 MiB).
                pl.BlockSpec((num_items, num_hidden), lambda i: (0, 0)),  # W1 bf16
                pl.BlockSpec((1, num_hidden), lambda i: (0, 0)),          # b1 f32
                pl.BlockSpec((num_hidden, num_items), lambda i: (0, 0)),  # W2 bf16
                pl.BlockSpec((1, num_items), lambda i: (0, 0)),           # b2 f32
            ],
            out_specs=pl.BlockSpec((tile_batch, num_items), lambda i: (i, 0)),
        ),
        compiler_params=pltpu.CompilerParams(
            dimension_semantics=("parallel",),   # batch tiles shard across v7x TCs
            vmem_limit_bytes=vmem_limit,
        ),
        cost_estimate=cost,
    )(x_in, w1b, b1f, w2b, b2f)

    return out[:B] if b_pad != B else out


def init_autorec_params(key, num_items, num_hidden, dtype=jnp.float32):
    """Deterministic init mimicking PyTorch nn.Linear default (uniform +-1/sqrt(fan_in))."""
    k1, k2, k3, k4 = jax.random.split(key, 4)
    bound1 = 1.0 / math.sqrt(num_items)
    bound2 = 1.0 / math.sqrt(num_hidden)
    # stored as (in, out) so the kernel does x @ W
    w1 = jax.random.uniform(k1, (num_items, num_hidden), dtype, -bound1, bound1)
    b1 = jax.random.uniform(k2, (1, num_hidden), dtype, -bound1, bound1)
    w2 = jax.random.uniform(k3, (num_hidden, num_items), dtype, -bound2, bound2)
    b2 = jax.random.uniform(k4, (1, num_items), dtype, -bound2, bound2)
    return w1, b1, w2, b2


if __name__ == "__main__":
    # config: num_users irrelevant to forward; MXU-friendly small demo shapes.
    batch = 256        # 2 batch tiles of 128 -> grid length 2 ("parallel" axis)
    num_items = 512    # multiple of 256 (full MXU tiles on v6e/v7x)
    num_hidden = 256

    key = jax.random.PRNGKey(0)
    kx, kp = jax.random.split(key)
    # input row = one item's rating vector (here: generic dense matrix)
    x = jax.random.uniform(kx, (batch, num_items), jnp.float32)
    w1, b1, w2, b2 = init_autorec_params(kp, num_items, num_hidden)

    out = autorec_forward(x, w1, b1, w2, b2, tile_batch=128)
    out = jax.block_until_ready(out)
    assert out.shape == (batch, num_items)

    # reference check in plain JAX with the same bf16 operands / f32 accumulation
    w1b, w2b = w1.astype(jnp.bfloat16), w2.astype(jnp.bfloat16)
    h_ref = jnp.maximum(
        jnp.dot(x.astype(jnp.bfloat16), w1b,
                preferred_element_type=jnp.float32) + b1, 0.0)
    ref = jnp.maximum(
        jnp.dot(h_ref.astype(jnp.bfloat16), w2b,
                preferred_element_type=jnp.float32) + b2, 0.0)
    max_err = float(jnp.max(jnp.abs(out - ref)))
    assert jnp.allclose(out, ref, atol=5e-3, rtol=5e-3), max_err

    print("KERNEL_OK")
</pallas_src>

<mosaic_0001>
module attributes {stable_mosaic.version = 11 : i64} {
  func.func @autorec_kernel(%arg0: i32, %arg1: memref<128x512xf32, #tpu.memory_space<vmem>>, %arg2: memref<512x256xbf16, #tpu.memory_space<vmem>>, %arg3: memref<1x256xf32, #tpu.memory_space<vmem>>, %arg4: memref<256x512xbf16, #tpu.memory_space<vmem>>, %arg5: memref<1x512xf32, #tpu.memory_space<vmem>>, %arg6: memref<128x512xf32, #tpu.memory_space<vmem>>) attributes {dimension_semantics = [#tpu.dimension_semantics<parallel>], iteration_bounds = array<i64: 2>, scalar_prefetch = 0 : i64, scratch_operands = 0 : i64, tpu.core_type = #tpu.core_type<tc>, window_params = [{transform_indices = @transform_0, window_bounds = array<i64: 128, 512>}, {pipeline_mode = #tpu.pipeline_mode<synchronous>, transform_indices = @transform_1, window_bounds = array<i64: 512, 256>}, {pipeline_mode = #tpu.pipeline_mode<synchronous>, transform_indices = @transform_2, window_bounds = array<i64: 1, 256>}, {pipeline_mode = #tpu.pipeline_mode<synchronous>, transform_indices = @transform_3, window_bounds = array<i64: 256, 512>}, {pipeline_mode = #tpu.pipeline_mode<synchronous>, transform_indices = @transform_4, window_bounds = array<i64: 1, 512>}, {transform_indices = @transform_5, window_bounds = array<i64: 128, 512>}]} {
    %c0 = arith.constant 0 : index
    %c0_0 = arith.constant 0 : index
    %0 = vector.load %arg1[%c0, %c0_0] : memref<128x512xf32, #tpu.memory_space<vmem>>, vector<128x512xf32>
    %1 = arith.truncf %0 : vector<128x512xf32> to vector<128x512xbf16>
    %c0_1 = arith.constant 0 : index
    %c0_2 = arith.constant 0 : index
    %2 = vector.load %arg2[%c0_1, %c0_2] : memref<512x256xbf16, #tpu.memory_space<vmem>>, vector<512x256xbf16>
    %cst = arith.constant dense<0.000000e+00> : vector<128x256xf32>
    %3 = tpu.matmul %1, %2, %cst {dimension_numbers = #tpu.dot_dimension_numbers<[1], [0], [0], [1], [0, 0, 1, 1], [], []>} : vector<128x512xbf16>, vector<512x256xbf16>, vector<128x256xf32> -> vector<128x256xf32>
    %c0_3 = arith.constant 0 : index
    %c0_4 = arith.constant 0 : index
    %4 = vector.load %arg3[%c0_3, %c0_4] : memref<1x256xf32, #tpu.memory_space<vmem>>, vector<1x256xf32>
    %5 = vector.broadcast %4 : vector<1x256xf32> to vector<128x256xf32>
    %6 = arith.addf %3, %5 : vector<128x256xf32>
    %cst_5 = arith.constant 0.000000e+00 : f32
    %7 = vector.broadcast %cst_5 : f32 to vector<128x256xf32>
    %8 = arith.maximumf %6, %7 : vector<128x256xf32>
    %9 = arith.truncf %8 : vector<128x256xf32> to vector<128x256xbf16>
    %c0_6 = arith.constant 0 : index
    %c0_7 = arith.constant 0 : index
    %10 = vector.load %arg4[%c0_6, %c0_7] : memref<256x512xbf16, #tpu.memory_space<vmem>>, vector<256x512xbf16>
    %cst_8 = arith.constant dense<0.000000e+00> : vector<128x512xf32>
    %11 = tpu.matmul %9, %10, %cst_8 {dimension_numbers = #tpu.dot_dimension_numbers<[1], [0], [0], [1], [0, 0, 1, 1], [], []>} : vector<128x256xbf16>, vector<256x512xbf16>, vector<128x512xf32> -> vector<128x512xf32>
    %c0_9 = arith.constant 0 : index
    %c0_10 = arith.constant 0 : index
    %12 = vector.load %arg5[%c0_9, %c0_10] : memref<1x512xf32, #tpu.memory_space<vmem>>, vector<1x512xf32>
    %13 = vector.broadcast %12 : vector<1x512xf32> to vector<128x512xf32>
    %14 = arith.addf %11, %13 : vector<128x512xf32>
    %cst_11 = arith.constant 0.000000e+00 : f32
    %15 = vector.broadcast %cst_11 : f32 to vector<128x512xf32>
    %16 = arith.maximumf %14, %15 : vector<128x512xf32>
    %c0_12 = arith.constant 0 : index
    %c0_13 = arith.constant 0 : index
    %17 = vector.load %arg6[%c0_12, %c0_13] : memref<128x512xf32, #tpu.memory_space<vmem>>, vector<128x512xf32>
    tpu.vector_store %arg6[%c0_12, %c0_13], %16 {strides = array<i32>} : memref<128x512xf32, #tpu.memory_space<vmem>>, vector<128x512xf32>,
    return
  }
  func.func @transform_0(%arg0: i32) -> (i32, i32) {
    %c0_i32 = arith.constant 0 : i32
    %c0_i32_0 = arith.constant 0 : i32
    return %arg0, %c0_i32 : i32, i32
  }
  func.func @transform_1(%arg0: i32) -> (i32, i32) {
    %c0_i32 = arith.constant 0 : i32
    %c0_i32_0 = arith.constant 0 : i32
    %c0_i32_1 = arith.constant 0 : i32
    return %c0_i32, %c0_i32_0 : i32, i32
  }
  func.func @transform_2(%arg0: i32) -> (i32, i32) {
    %c0_i32 = arith.constant 0 : i32
    %c0_i32_0 = arith.constant 0 : i32
    %c0_i32_1 = arith.constant 0 : i32
    return %c0_i32, %c0_i32_0 : i32, i32
  }
  func.func @transform_3(%arg0: i32) -> (i32, i32) {
    %c0_i32 = arith.constant 0 : i32
    %c0_i32_0 = arith.constant 0 : i32
    %c0_i32_1 = arith.constant 0 : i32
    return %c0_i32, %c0_i32_0 : i32, i32
  }
  func.func @transform_4(%arg0: i32) -> (i32, i32) {
    %c0_i32 = arith.constant 0 : i32
    %c0_i32_0 = arith.constant 0 : i32
    %c0_i32_1 = arith.constant 0 : i32
    return %c0_i32, %c0_i32_0 : i32, i32
  }
  func.func @transform_5(%arg0: i32) -> (i32, i32) {
    %c0_i32 = arith.constant 0 : i32
    %c0_i32_0 = arith.constant 0 : i32
    return %arg0, %c0_i32 : i32, i32
  }
}

</mosaic_0001>

<llo_original>
// kernel: tpu_custom_call.1
$region0: #{tpu_custom_call.1}
  #allocation0 [shape = 'u32[]', space=smem, size = 0x4, offset = 0x4, fixed_abs, tag = 'smem constant byte address 0x4 - core index']
  #allocation1 [shape = 'u32[144,128]{1,0:T(1,128)}', space=vmem, size = 0x12000, scoped, tag = 'internal scratch']
  %s0 = inlined_call_operand.hbm [shape: f32[256,512], index: 0, kind: input, shape index: {}]
  %s1 = inlined_call_operand.hbm [shape: bf16[512,256], index: 1, kind: input, shape index: {}]
  %s2 = inlined_call_operand.vmem [shape: f32[1,256], index: 2, kind: input, shape index: {}]
  %s3 = inlined_call_operand.hbm [shape: bf16[256,512], index: 3, kind: input, shape index: {}]
  %s4 = inlined_call_operand.vmem [shape: f32[1,512], index: 4, kind: input, shape index: {}]
  %s5 = inlined_call_operand.hbm [shape: f32[256,512], index: 5, kind: output, shape index: {}]
  %s6 = sld [smem:[#allocation0]]
  $region65: #{tpu_custom_call.1} parent=0
    _
  %s8 = ssub.s32 1, %s6
  %s9 = scalar_select 0, %s8, %s6
  $region1: #{tpu_custom_call.1} parent=0
    #allocation2 [shape = 'u8[524288]{0}', space=vmem, size = 0x80000, scoped, tag = 'input window, operand 0']
    #allocation3 [shape = 's32[2]{0}', space=sflag, size = 0x8, scoped, tag = 'scoped memory for tpu_custom_call.1']
    #allocation4 [shape = 's32[2]{0}', space=sflag, size = 0x8, scoped, tag = 'scoped memory for tpu_custom_call.1']
    #allocation5 [shape = 'u8[262144]{0}', space=vmem, size = 0x40000, scoped, tag = 'input window, operand 1, single buffered']
    #allocation6 [shape = 's32[1]{0}', space=sflag, size = 0x4, scoped, tag = 'scoped memory for tpu_custom_call.1']
    #allocation7 [shape = 'u8[262144]{0}', space=vmem, size = 0x40000, scoped, tag = 'input window, operand 3, single buffered']
    #allocation8 [shape = 'u8[524288]{0}', space=vmem, size = 0x80000, scoped, tag = 'output window, operand 0']
    %10 = vsyncpa [#allocation3], 0
    %s11 = scalar_lea.sflag [#allocation3], 1
    %12 = vsyncpa %s11, 0
    %13 = vsyncpa [#allocation6], 0
    %14 = vsyncpa [#allocation4], 0
    %s15 = scalar_lea.sflag [#allocation4], 1
    %16 = vsyncpa %s15, 0
    loop: start=0, step=1, limit=4
    $region2: #{tpu_custom_call.1} parent=1 // loop_pre_header
      _
    $region3: #{tpu_custom_call.1} parent=1 // loop_header
      %s18 = sphi 0, %s22
      %p19 = scmp.ge.s32.totalorder %s18, 4
      %s28 = sphi 0, %s30
      %s31 = sphi 0, %s28
      %s32 = sphi 0, %s31
      %s48 = sphi 0, %s32
      %s52 = sphi 0, %s52
      %s54 = sphi 0, %s52
      %s55 = sphi 0, %s54
      %s69 = sphi 0, %s55
      %s73 = sphi 0, %s73
      %s75 = sphi 0, %s73
      %s76 = sphi 0, %s75
      %s90 = sphi 0, %s76
      %s94 = sphi 0, %s94
      %s96 = sphi 0, %s94
      %s97 = sphi 0, %s96
      %s111 = sphi 0, %s97
      %s115 = sphi 0, %s115
      %s117 = sphi 0, %s115
      %s118 = sphi 0, %s117
      %s132 = sphi 0, %s118
      %s138 = sphi 0, %s140
      %s141 = sphi 0, %s138
      %s142 = sphi 0, %s141
      %s158 = sphi 0, %s142
    $region4: #{tpu_custom_call.1} parent=1 // loop_header_branch
      %21 = sbr.rel (%p19) target = $region8
    $region5: #{tpu_custom_call.1} parent=1 // loop_body
      %s23 = ssub.s32 %s18, 1
      %s24 = ssub.s32 %s18, 2
      %s25 = sadd.s32 %s18, 1
      %s26 = ssub.s32 %s18, %s25
      %p27 = scmp.eq.s32.totalorder %s26, 0
      %s29 = sadd.s32 %s28, 1
      %s30 = scalar_select %p27, %s28, %s29
      %p33 = pneg %p27
      %p34 = scmp.eq.s32.totalorder %s18, 1
      %p35 = por %p33, %p34
      %p36 = scmp.ne.s32.totalorder %s28, %s31
      %p37 = scmp.eq.s32.totalorder %s18, 0
      %p38 = por %p36, %p37
      %p39 = scmp.ne.s32.totalorder %s28, %s31
      %p40 = scmp.eq.s32.totalorder %s23, 1
      %p41 = por %p39, %p40
      %p42 = scmp.ne.s32.totalorder %s31, %s32
      %p43 = scmp.eq.s32.totalorder %s23, 0
      %p44 = por %p42, %p43
      %p45 = scmp.ne.s32.totalorder %s31, %s32
      %p46 = scmp.eq.s32.totalorder %s24, 1
      %p47 = por %p45, %p46
      %p49 = scmp.ne.s32.totalorder %s32, %s48
      %p50 = scmp.eq.s32.totalorder %s24, 0
      %p51 = por %p49, %p50
      %s53 = sadd.s32 %s52, 1
      %p56 = scmp.eq.s32.totalorder %s18, 1
      %p57 = scmp.ne.s32.totalorder %s52, %s54
      %p58 = scmp.eq.s32.totalorder %s18, 0
      %p59 = por %p57, %p58
      %p60 = scmp.ne.s32.totalorder %s52, %s54
      %p61 = scmp.eq.s32.totalorder %s23, 1
      %p62 = por %p60, %p61
      %p63 = scmp.ne.s32.totalorder %s54, %s55
      %p64 = scmp.eq.s32.totalorder %s23, 0
      %p65 = por %p63, %p64
      %p66 = scmp.ne.s32.totalorder %s54, %s55
      %p67 = scmp.eq.s32.totalorder %s24, 1
      %p68 = por %p66, %p67
      %p70 = scmp.ne.s32.totalorder %s55, %s69
      %p71 = scmp.eq.s32.totalorder %s24, 0
      %p72 = por %p70, %p71
      %s74 = sadd.s32 %s73, 1
      %p77 = scmp.eq.s32.totalorder %s18, 1
      %p78 = scmp.ne.s32.totalorder %s73, %s75
      %p79 = scmp.eq.s32.totalorder %s18, 0
      %p80 = por %p78, %p79
      %p81 = scmp.ne.s32.totalorder %s73, %s75
      %p82 = scmp.eq.s32.totalorder %s23, 1
      %p83 = por %p81, %p82
      %p84 = scmp.ne.s32.totalorder %s75, %s76
      %p85 = scmp.eq.s32.totalorder %s23, 0
      %p86 = por %p84, %p85
      %p87 = scmp.ne.s32.totalorder %s75, %s76
      %p88 = scmp.eq.s32.totalorder %s24, 1
      %p89 = por %p87, %p88
      %p91 = scmp.ne.s32.totalorder %s76, %s90
      %p92 = scmp.eq.s32.totalorder %s24, 0
      %p93 = por %p91, %p92
      %s95 = sadd.s32 %s94, 1
      %p98 = scmp.eq.s32.totalorder %s18, 1
      %p99 = scmp.ne.s32.totalorder %s94, %s96
      %p100 = scmp.eq.s32.totalorder %s18, 0
      %p101 = por %p99, %p100
      %p102 = scmp.ne.s32.totalorder %s94, %s96
      %p103 = scmp.eq.s32.totalorder %s23, 1
      %p104 = por %p102, %p103
      %p105 = scmp.ne.s32.totalorder %s96, %s97
      %p106 = scmp.eq.s32.totalorder %s23, 0
      %p107 = por %p105, %p106
      %p108 = scmp.ne.s32.totalorder %s96, %s97
      %p109 = scmp.eq.s32.totalorder %s24, 1
      %p110 = por %p108, %p109
      %p112 = scmp.ne.s32.totalorder %s97, %s111
      %p113 = scmp.eq.s32.totalorder %s24, 0
      %p114 = por %p112, %p113
      %s116 = sadd.s32 %s115, 1
      %p119 = scmp.eq.s32.totalorder %s18, 1
      %p120 = scmp.ne.s32.totalorder %s115, %s117
      %p121 = scmp.eq.s32.totalorder %s18, 0
      %p122 = por %p120, %p121
      %p123 = scmp.ne.s32.totalorder %s115, %s117
      %p124 = scmp.eq.s32.totalorder %s23, 1
      %p125 = por %p123, %p124
      %p126 = scmp.ne.s32.totalorder %s117, %s118
      %p127 = scmp.eq.s32.totalorder %s23, 0
      %p128 = por %p126, %p127
      %p129 = scmp.ne.s32.totalorder %s117, %s118
      %p130 = scmp.eq.s32.totalorder %s24, 1
      %p131 = por %p129, %p130
      %p133 = scmp.ne.s32.totalorder %s118, %s132
      %p134 = scmp.eq.s32.totalorder %s24, 0
      %p135 = por %p133, %p134
      %s136 = ssub.s32 %s18, %s25
      %p137 = scmp.eq.s32.totalorder %s136, 0
      %s139 = sadd.s32 %s138, 1
      %s140 = scalar_select %p137, %s138, %s139
      %p143 = pneg %p137
      %p144 = scmp.eq.s32.totalorder %s18, 1
      %p145 = por %p143, %p144
      %p146 = scmp.ne.s32.totalorder %s138, %s141
      %p147 = scmp.eq.s32.totalorder %s18, 0
      %p148 = por %p146, %p147
      %p149 = scmp.ne.s32.totalorder %s138, %s141
      %p150 = scmp.eq.s32.totalorder %s23, 1
      %p151 = por %p149, %p150
      %p152 = scmp.ne.s32.totalorder %s141, %s142
      %p153 = scmp.eq.s32.totalorder %s23, 0
      %p154 = por %p152, %p153
      %p155 = scmp.ne.s32.totalorder %s141, %s142
      %p156 = scmp.eq.s32.totalorder %s24, 1
      %p157 = por %p155, %p156
      %p159 = scmp.ne.s32.totalorder %s142, %s158
      %p160 = scmp.eq.s32.totalorder %s24, 0
      %p161 = por %p159, %p160
      %p162 = scmp.le.s32.totalorder 1, %s18
      %p163 = scmp.lt.s32.totalorder %s18, 3
      %p164 = pnand %p162, %p163
      %p165 = pneg %p164
      // Predicated region
      $region9: #{tpu_custom_call.1} parent=5 // pred_check
        _
      $region10: #{tpu_custom_call.1} parent=5 // pred_check_branch
        %167 = sbr.rel (%p164) target = $region12
      $region11: #{tpu_custom_call.1} parent=5 // pred_region
        %s168 = ssub.s32 %s18, 1
        // Predicated region
        $region13: #{tpu_custom_call.1} parent=11 // pred_check
          %p169 = pneg %p65
        $region14: #{tpu_custom_call.1} parent=11 // pred_check_branch
          %171 = sbr.rel (%p169) target = $region16
        $region15: #{tpu_custom_call.1} parent=11 // pred_region
          %s173 = ssub.s32 8192, 8192
          %174 = vsyncadd [#allocation6], %s173
          %s175 = sshll.u32 [#allocation5], 4
          %s176 = int_to_ptr.vmem [resolvable:$true] %s175
          %181 = dma.hbm_to_vmem [thread:$0]  %s1, 8192, %s176, [#allocation6], 128, 128, 8
        $region16: #{tpu_custom_call.1} parent=11 // pred_fallthru
          _
        // Predicated region
        $region17: #{tpu_custom_call.1} parent=11 // pred_check
          %p182 = pneg %p86
        $region18: #{tpu_custom_call.1} parent=11 // pred_check_branch
          %184 = sbr.rel (%p182) target = $region20
        $region19: #{tpu_custom_call.1} parent=11 // pred_region
          _
        $region20: #{tpu_custom_call.1} parent=11 // pred_fallthru
          _
        // Predicated region
        $region21: #{tpu_custom_call.1} parent=11 // pred_check
          %p185 = pneg %p107
        $region22: #{tpu_custom_call.1} parent=11 // pred_check_branch
          %187 = sbr.rel (%p185) target = $region24
        $region23: #{tpu_custom_call.1} parent=11 // pred_region
          %s189 = ssub.s32 8192, 8192
          %190 = vsyncadd [#allocation6], %s189
          %s191 = sshll.u32 [#allocation7], 4
          %s192 = int_to_ptr.vmem [resolvable:$true] %s191
          %197 = dma.hbm_to_vmem [thread:$0]  %s3, 8192, %s192, [#allocation6], 256, 256, 16
        $region24: #{tpu_custom_call.1} parent=11 // pred_fallthru
          _
        // Predicated region
        $region25: #{tpu_custom_call.1} parent=11 // pred_check
          %p198 = pneg %p128
        $region26: #{tpu_custom_call.1} parent=11 // pred_check_branch
          %200 = sbr.rel (%p198) target = $region28
        $region27: #{tpu_custom_call.1} parent=11 // pred_region
          _
        $region28: #{tpu_custom_call.1} parent=11 // pred_fallthru
          _
      $region12: #{tpu_custom_call.1} parent=5 // pred_fallthru
        _
      %p201 = scmp.lt.s32.totalorder %s18, 2
      // Predicated region
      $region29: #{tpu_custom_call.1} parent=5 // pred_check
        %p202 = pneg %p201
      $region30: #{tpu_custom_call.1} parent=5 // pred_check_branch
        %204 = sbr.rel (%p202) target = $region32
      $region31: #{tpu_custom_call.1} parent=5 // pred_region
        // Predicated region
        $region33: #{tpu_custom_call.1} parent=31 // pred_check
          %p205 = pneg %p38
        $region34: #{tpu_custom_call.1} parent=31 // pred_check_branch
          %207 = sbr.rel (%p205) target = $region36
        $region35: #{tpu_custom_call.1} parent=31 // pred_region
          %s208 = sand.u32 %s28, 1
          %s209 = scalar_lea.sflag [#allocation3], %s208
          %s210 = sand.u32 %s28, 1
          %s211 = smul.addr %s210, 512
          %s212 = scalar_lea.vmem [#allocation2], %s211
          %s213 = smul.u32 16, %s18
          %s215 = ssub.s32 8192, 8192
          %216 = vsyncadd %s209, %s215
          %s217 = smul.addr %s213, 4
          %s218 = smul.addr %s217, 128
          %s219 = scalar_lea.hbm %s0, %s218
          %s220 = sshll.u32 %s212, 4
          %s221 = int_to_ptr.vmem [resolvable:$true] %s220
          %226 = dma.hbm_to_vmem [thread:$0]  %s219, 8192, %s221, %s209, 512, 512, 32
        $region36: #{tpu_custom_call.1} parent=31 // pred_fallthru
          _
      $region32: #{tpu_custom_call.1} parent=5 // pred_fallthru
        _
      %p227 = scmp.le.s32.totalorder 1, %s18
      %p228 = scmp.lt.s32.totalorder %s18, 3
      %p229 = pnand %p227, %p228
      %p230 = pneg %p229
      // Predicated region
      $region37: #{tpu_custom_call.1} parent=5 // pred_check
        _
      $region38: #{tpu_custom_call.1} parent=5 // pred_check_branch
        %232 = sbr.rel (%p229) target = $region40
      $region39: #{tpu_custom_call.1} parent=5 // pred_region
        %s233 = ssub.s32 %s18, 1
        %s234 = sand.u32 %s31, 1
        %s235 = scalar_lea.sflag [#allocation3], %s234
        %s236 = sand.u32 %s31, 1
        %s237 = smul.addr %s236, 512
        %s238 = scalar_lea.vmem [#allocation2], %s237
        // Predicated region
        $region41: #{tpu_custom_call.1} parent=39 // pred_check
          %p239 = pneg %p44
        $region42: #{tpu_custom_call.1} parent=39 // pred_check_branch
          %241 = sbr.rel (%p239) target = $region44
        $region43: #{tpu_custom_call.1} parent=39 // pred_region
          %242 = dma.done %s235, 8192
        $region44: #{tpu_custom_call.1} parent=39 // pred_fallthru
          _
        // Predicated region
        $region45: #{tpu_custom_call.1} parent=39 // pred_check
          %p243 = pneg %p65
        $region46: #{tpu_custom_call.1} parent=39 // pred_check_branch
          %245 = sbr.rel (%p243) target = $region48
        $region47: #{tpu_custom_call.1} parent=39 // pred_region
          %246 = dma.done [#allocation6], 8192
        $region48: #{tpu_custom_call.1} parent=39 // pred_fallthru
          _
        // Predicated region
        $region49: #{tpu_custom_call.1} parent=39 // pred_check
          %p247 = pneg %p107
        $region50: #{tpu_custom_call.1} parent=39 // pred_check_branch
          %249 = sbr.rel (%p247) target = $region52
        $region51: #{tpu_custom_call.1} parent=39 // pred_region
          %250 = dma.done [#allocation6], 8192
        $region52: #{tpu_custom_call.1} parent=39 // pred_fallthru
          _
        %s251 = sand.u32 %s31, 1
        %s252 = scalar_lea.sflag [#allocation3], %s251
        %s253 = sand.u32 %s31, 1
        %s254 = smul.addr %s253, 512
        %s255 = scalar_lea.vmem [#allocation2], %s254
        %p256 = pneg %p44
        %p257 = pneg %p41
        %p258 = pneg %p65
        %p259 = pneg %p62
        %p260 = pneg %p86
        %p261 = pneg %p83
        %p262 = pneg %p107
        %p263 = pneg %p104
        %p264 = pneg %p128
        %p265 = pneg %p125
        %p266 = pneg %p154
        %p267 = pneg %p151
        %s268 = sand.u32 %s141, 1
        %s269 = scalar_lea.sflag [#allocation4], %s268
        %s270 = sand.u32 %s141, 1
        %s271 = smul.addr %s270, 512
        %s272 = scalar_lea.vmem [#allocation8], %s271
        %s273 = smul.u32 16, %s23
        %s274 = smul.u32 16, %s23
        %v275 = vld [vmem:[%s238] sm:$0xff]
        %v276 = vld [vmem:[%s238 + $0x8] sm:$0xff]
        %v277 = vld [vmem:[%s238 + $0x10] sm:$0xff]
        %v278 = vld [vmem:[%s238 + $0x18] sm:$0xff]
        %v279 = vld [vmem:[%s238 + $0x20] sm:$0xff]
        %v280 = vld [vmem:[%s238 + $0x28] sm:$0xff]
        %v281 = vld [vmem:[%s238 + $0x30] sm:$0xff]
        %v282 = vld [vmem:[%s238 + $0x38] sm:$0xff]
        %v283 = vld [vmem:[%s238 + $0x40] sm:$0xff]
        %v284 = vld [vmem:[%s238 + $0x48] sm:$0xff]
        %v285 = vld [vmem:[%s238 + $0x50] sm:$0xff]
        %v286 = vld [vmem:[%s238 + $0x58] sm:$0xff]
        %v287 = vld [vmem:[%s238 + $0x60] sm:$0xff]
        %v288 = vld [vmem:[%s238 + $0x68] sm:$0xff]
        %v289 = vld [vmem:[%s238 + $0x70] sm:$0xff]
        %v290 = vld [vmem:[%s238 + $0x78] sm:$0xff]
        %v291 = vld [vmem:[%s238 + $0x80] sm:$0xff]
        %v292 = vld [vmem:[%s238 + $0x88] sm:$0xff]
        %v293 = vld [vmem:[%s238 + $0x90] sm:$0xff]
        %v294 = vld [vmem:[%s238 + $0x98] sm:$0xff]
        %v295 = vld [vmem:[%s238 + $0xa0] sm:$0xff]
        %v296 = vld [vmem:[%s238 + $0xa8] sm:$0xff]
        %v297 = vld [vmem:[%s238 + $0xb0] sm:$0xff]
        %v298 = vld [vmem:[%s238 + $0xb8] sm:$0xff]
        %v299 = vld [vmem:[%s238 + $0xc0] sm:$0xff]
        %v300 = vld [vmem:[%s238 + $0xc8] sm:$0xff]
        %v301 = vld [vmem:[%s238 + $0xd0] sm:$0xff]
        %v302 = vld [vmem:[%s238 + $0xd8] sm:$0xff]
        %v303 = vld [vmem:[%s238 + $0xe0] sm:$0xff]
        %v304 = vld [vmem:[%s238 + $0xe8] sm:$0xff]
        %v305 = vld [vmem:[%s238 + $0xf0] sm:$0xff]
        %v306 = vld [vmem:[%s238 + $0xf8] sm:$0xff]
        %v307 = vld [vmem:[%s238 + $0x100] sm:$0xff]
        %v308 = vld [vmem:[%s238 + $0x108] sm:$0xff]
        %v309 = vld [vmem:[%s238 + $0x110] sm:$0xff]
        %v310 = vld [vmem:[%s238 + $0x118] sm:$0xff]
        %v311 = vld [vmem:[%s238 + $0x120] sm:$0xff]
        %v312 = vld [vmem:[%s238 + $0x128] sm:$0xff]
        %v313 = vld [vmem:[%s238 + $0x130] sm:$0xff]
        %v314 = vld [vmem:[%s238 + $0x138] sm:$0xff]
        %v315 = vld [vmem:[%s238 + $0x140] sm:$0xff]
        %v316 = vld [vmem:[%s238 + $0x148] sm:$0xff]
        %v317 = vld [vmem:[%s238 + $0x150] sm:$0xff]
        %v318 = vld [vmem:[%s238 + $0x158] sm:$0xff]
        %v319 = vld [vmem:[%s238 + $0x160] sm:$0xff]
        %v320 = vld [vmem:[%s238 + $0x168] sm:$0xff]
        %v321 = vld [vmem:[%s238 + $0x170] sm:$0xff]
        %v322 = vld [vmem:[%s238 + $0x178] sm:$0xff]
        %v323 = vld [vmem:[%s238 + $0x180] sm:$0xff]
        %v324 = vld [vmem:[%s238 + $0x188] sm:$0xff]
        %v325 = vld [vmem:[%s238 + $0x190] sm:$0xff]
        %v326 = vld [vmem:[%s238 + $0x198] sm:$0xff]
        %v327 = vld [vmem:[%s238 + $0x1a0] sm:$0xff]
        %v328 = vld [vmem:[%s238 + $0x1a8] sm:$0xff]
        %v329 = vld [vmem:[%s238 + $0x1b0] sm:$0xff]
        %v330 = vld [vmem:[%s238 + $0x1b8] sm:$0xff]
        %v331 = vld [vmem:[%s238 + $0x1c0] sm:$0xff]
        %v332 = vld [vmem:[%s238 + $0x1c8] sm:$0xff]
        %v333 = vld [vmem:[%s238 + $0x1d0] sm:$0xff]
        %v334 = vld [vmem:[%s238 + $0x1d8] sm:$0xff]
        %v335 = vld [vmem:[%s238 + $0x1e0] sm:$0xff]
        %v336 = vld [vmem:[%s238 + $0x1e8] sm:$0xff]
        %v337 = vld [vmem:[%s238 + $0x1f0] sm:$0xff]
        %v338 = vld [vmem:[%s238 + $0x1f8] sm:$0xff]
        %v339 = vpack.c.bf16 %v279, %v275
        %v340 = vpack.c.bf16 %v280, %v276
        %v341 = vpack.c.bf16 %v281, %v277
        %v342 = vpack.c.bf16 %v282, %v278
        %v343 = vpack.c.bf16 %v287, %v283
        %v344 = vpack.c.bf16 %v288, %v284
        %v345 = vpack.c.bf16 %v289, %v285
        %v346 = vpack.c.bf16 %v290, %v286
        %v347 = vpack.c.bf16 %v295, %v291
        %v348 = vpack.c.bf16 %v296, %v292
        %v349 = vpack.c.bf16 %v297, %v293
        %v350 = vpack.c.bf16 %v298, %v294
        %v351 = vpack.c.bf16 %v303, %v299
        %v352 = vpack.c.bf16 %v304, %v300
        %v353 = vpack.c.bf16 %v305, %v301
        %v354 = vpack.c.bf16 %v306, %v302
        %v355 = vpack.c.bf16 %v311, %v307
        %v356 = vpack.c.bf16 %v312, %v308
        %v357 = vpack.c.bf16 %v313, %v309
        %v358 = vpack.c.bf16 %v314, %v310
        %v359 = vpack.c.bf16 %v319, %v315
        %v360 = vpack.c.bf16 %v320, %v316
        %v361 = vpack.c.bf16 %v321, %v317
        %v362 = vpack.c.bf16 %v322, %v318
        %v363 = vpack.c.bf16 %v327, %v323
        %v364 = vpack.c.bf16 %v328, %v324
        %v365 = vpack.c.bf16 %v329, %v325
        %v366 = vpack.c.bf16 %v330, %v326
        %v367 = vpack.c.bf16 %v335, %v331
        %v368 = vpack.c.bf16 %v336, %v332
        %v369 = vpack.c.bf16 %v337, %v333
        %v370 = vpack.c.bf16 %v338, %v334
        %v371 = vld [vmem:[#allocation5] sm:$0xff]
        %v372 = vld [vmem:[#allocation5 + $0x8] sm:$0xff]
        %v373 = vld [vmem:[#allocation5 + $0x10] sm:$0xff]
        %v374 = vld [vmem:[#allocation5 + $0x18] sm:$0xff]
        %v375 = vld [vmem:[#allocation5 + $0x20] sm:$0xff]
        %v376 = vld [vmem:[#allocation5 + $0x28] sm:$0xff]
        %v377 = vld [vmem:[#allocation5 + $0x30] sm:$0xff]
        %v378 = vld [vmem:[#allocation5 + $0x38] sm:$0xff]
        %v379 = vld [vmem:[#allocation5 + $0x40] sm:$0xff]
        %v380 = vld [vmem:[#allocation5 + $0x48] sm:$0xff]
        %v381 = vld [vmem:[#allocation5 + $0x50] sm:$0xff]
        %v382 = vld [vmem:[#allocation5 + $0x58] sm:$0xff]
        %v383 = vld [vmem:[#allocation5 + $0x60] sm:$0xff]
        %v384 = vld [vmem:[#allocation5 + $0x68] sm:$0xff]
        %v385 = vld [vmem:[#allocation5 + $0x70] sm:$0xff]
        %v386 = vld [vmem:[#allocation5 + $0x78] sm:$0xff]
        %v387 = vld [vmem:[#allocation5 + $0x80] sm:$0xff]
        %v388 = vld [vmem:[#allocation5 + $0x88] sm:$0xff]
        %v389 = vld [vmem:[#allocation5 + $0x90] sm:$0xff]
        %v390 = vld [vmem:[#allocation5 + $0x98] sm:$0xff]
        %v391 = vld [vmem:[#allocation5 + $0xa0] sm:$0xff]
        %v392 = vld [vmem:[#allocation5 + $0xa8] sm:$0xff]
        %v393 = vld [vmem:[#allocation5 + $0xb0] sm:$0xff]
        %v394 = vld [vmem:[#allocation5 + $0xb8] sm:$0xff]
        %v395 = vld [vmem:[#allocation5 + $0xc0] sm:$0xff]
        %v396 = vld [vmem:[#allocation5 + $0xc8] sm:$0xff]
        %v397 = vld [vmem:[#allocation5 + $0xd0] sm:$0xff]
        %v398 = vld [vmem:[#allocation5 + $0xd8] sm:$0xff]
        %v399 = vld [vmem:[#allocation5 + $0xe0] sm:$0xff]
        %v400 = vld [vmem:[#allocation5 + $0xe8] sm:$0xff]
        %v401 = vld [vmem:[#allocation5 + $0xf0] sm:$0xff]
        %v402 = vld [vmem:[#allocation5 + $0xf8] sm:$0xff]
        %v403 = vld [vmem:[#allocation5 + $0x100] sm:$0xff]
        %v404 = vld [vmem:[#allocation5 + $0x108] sm:$0xff]
        %v405 = vld [vmem:[#allocation5 + $0x110] sm:$0xff]
        %v406 = vld [vmem:[#allocation5 + $0x118] sm:$0xff]
        %v407 = vld [vmem:[#allocation5 + $0x120] sm:$0xff]
        %v408 = vld [vmem:[#allocation5 + $0x128] sm:$0xff]
        %v409 = vld [vmem:[#allocation5 + $0x130] sm:$0xff]
        %v410 = vld [vmem:[#allocation5 + $0x138] sm:$0xff]
        %v411 = vld [vmem:[#allocation5 + $0x140] sm:$0xff]
        %v412 = vld [vmem:[#allocation5 + $0x148] sm:$0xff]
        %v413 = vld [vmem:[#allocation5 + $0x150] sm:$0xff]
        %v414 = vld [vmem:[#allocation5 + $0x158] sm:$0xff]
        %v415 = vld [vmem:[#allocation5 + $0x160] sm:$0xff]
        %v416 = vld [vmem:[#allocation5 + $0x168] sm:$0xff]
        %v417 = vld [vmem:[#allocation5 + $0x170] sm:$0xff]
        %v418 = vld [vmem:[#allocation5 + $0x178] sm:$0xff]
        %v419 = vld [vmem:[#allocation5 + $0x180] sm:$0xff]
        %v420 = vld [vmem:[#allocation5 + $0x188] sm:$0xff]
        %v421 = vld [vmem:[#allocation5 + $0x190] sm:$0xff]
        %v422 = vld [vmem:[#allocation5 + $0x198] sm:$0xff]
        %v423 = vld [vmem:[#allocation5 + $0x1a0] sm:$0xff]
        %v424 = vld [vmem:[#allocation5 + $0x1a8] sm:$0xff]
        %v425 = vld [vmem:[#allocation5 + $0x1b0] sm:$0xff]
        %v426 = vld [vmem:[#allocation5 + $0x1b8] sm:$0xff]
        %v427 = vld [vmem:[#allocation5 + $0x1c0] sm:$0xff]
        %v428 = vld [vmem:[#allocation5 + $0x1c8] sm:$0xff]
        %v429 = vld [vmem:[#allocation5 + $0x1d0] sm:$0xff]
        %v430 = vld [vmem:[#allocation5 + $0x1d8] sm:$0xff]
        %v431 = vld [vmem:[#allocation5 + $0x1e0] sm:$0xff]
        %v432 = vld [vmem:[#allocation5 + $0x1e8] sm:$0xff]
        %v433 = vld [vmem:[#allocation5 + $0x1f0] sm:$0xff]
        %v434 = vld [vmem:[#allocation5 + $0x1f8] sm:$0xff]
        %v435 = vld [vmem:[%s2] sm:$0x3]
        %v437 = vlaneseq
        %v438 = vshrl.u32 %v437, 7
        %v439 = vsub.s32 0, %v438
        %v440 = vrot.slane %v435, %v439
        %v441 = vlaneseq
        %v442 = vshrl.u32 %v441, 7
        %v443 = vsub.s32 1, %v442
        %v444 = vrot.slane %v435, %v443
        %v511 = vunpack.c.l.b16 %v371
        %v512 = vunpack.c.h.b16 %v371
        %v513 = vunpack.c.l.b16 %v372
        %v514 = vunpack.c.h.b16 %v372
        %v515 = vunpack.c.l.b16 %v373
        %v516 = vunpack.c.h.b16 %v373
        %v517 = vunpack.c.l.b16 %v374
        %v518 = vunpack.c.h.b16 %v374
        %v519 = vunpack.c.l.b16 %v375
        %v520 = vunpack.c.h.b16 %v375
        %v521 = vunpack.c.l.b16 %v376
        %v522 = vunpack.c.h.b16 %v376
        %v523 = vunpack.c.l.b16 %v377
        %v524 = vunpack.c.h.b16 %v377
        %v525 = vunpack.c.l.b16 %v378
        %v526 = vunpack.c.h.b16 %v378
        %v527 = vunpack.c.l.b16 %v379
        %v528 = vunpack.c.h.b16 %v379
        %v529 = vunpack.c.l.b16 %v380
        %v530 = vunpack.c.h.b16 %v380
        %v531 = vunpack.c.l.b16 %v381
        %v532 = vunpack.c.h.b16 %v381
        %v533 = vunpack.c.l.b16 %v382
        %v534 = vunpack.c.h.b16 %v382
        %v535 = vunpack.c.l.b16 %v383
        %v536 = vunpack.c.h.b16 %v383
        %v537 = vunpack.c.l.b16 %v384
        %v538 = vunpack.c.h.b16 %v384
        %v539 = vunpack.c.l.b16 %v385
        %v540 = vunpack.c.h.b16 %v385
        %v541 = vunpack.c.l.b16 %v386
        %v542 = vunpack.c.h.b16 %v386
        %v543 = vunpack.c.l.b16 %v387
        %v544 = vunpack.c.h.b16 %v387
        %v545 = vunpack.c.l.b16 %v388
        %v546 = vunpack.c.h.b16 %v388
        %v547 = vunpack.c.l.b16 %v389
        %v548 = vunpack.c.h.b16 %v389
        %v549 = vunpack.c.l.b16 %v390
        %v550 = vunpack.c.h.b16 %v390
        %v551 = vunpack.c.l.b16 %v391
        %v552 = vunpack.c.h.b16 %v391
        %v553 = vunpack.c.l.b16 %v392
        %v554 = vunpack.c.h.b16 %v392
        %v555 = vunpack.c.l.b16 %v393
        %v556 = vunpack.c.h.b16 %v393
        %v557 = vunpack.c.l.b16 %v394
        %v558 = vunpack.c.h.b16 %v394
        %v559 = vunpack.c.l.b16 %v395
        %v560 = vunpack.c.h.b16 %v395
        %v561 = vunpack.c.l.b16 %v396
        %v562 = vunpack.c.h.b16 %v396
        %v563 = vunpack.c.l.b16 %v397
        %v564 = vunpack.c.h.b16 %v397
        %v565 = vunpack.c.l.b16 %v398
        %v566 = vunpack.c.h.b16 %v398
        %v567 = vunpack.c.l.b16 %v399
        %v568 = vunpack.c.h.b16 %v399
        %v569 = vunpack.c.l.b16 %v400
        %v570 = vunpack.c.h.b16 %v400
        %v571 = vunpack.c.l.b16 %v401
        %v572 = vunpack.c.h.b16 %v401
        %v573 = vunpack.c.l.b16 %v402
        %v574 = vunpack.c.h.b16 %v402
        %v575 = vunpack.c.l.b16 %v403
        %v576 = vunpack.c.h.b16 %v403
        %v577 = vunpack.c.l.b16 %v404
        %v578 = vunpack.c.h.b16 %v404
        %v579 = vunpack.c.l.b16 %v405
        %v580 = vunpack.c.h.b16 %v405
        %v581 = vunpack.c.l.b16 %v406
        %v582 = vunpack.c.h.b16 %v406
        %v583 = vunpack.c.l.b16 %v407
        %v584 = vunpack.c.h.b16 %v407
        %v585 = vunpack.c.l.b16 %v408
        %v586 = vunpack.c.h.b16 %v408
        %v587 = vunpack.c.l.b16 %v409
        %v588 = vunpack.c.h.b16 %v409
        %v589 = vunpack.c.l.b16 %v410
        %v590 = vunpack.c.h.b16 %v410
        %v591 = vunpack.c.l.b16 %v411
        %v592 = vunpack.c.h.b16 %v411
        %v593 = vunpack.c.l.b16 %v412
        %v594 = vunpack.c.h.b16 %v412
        %v595 = vunpack.c.l.b16 %v413
        %v596 = vunpack.c.h.b16 %v413
        %v597 = vunpack.c.l.b16 %v414
        %v598 = vunpack.c.h.b16 %v414
        %v599 = vunpack.c.l.b16 %v415
        %v600 = vunpack.c.h.b16 %v415
        %v601 = vunpack.c.l.b16 %v416
        %v602 = vunpack.c.h.b16 %v416
        %v603 = vunpack.c.l.b16 %v417
        %v604 = vunpack.c.h.b16 %v417
        %v605 = vunpack.c.l.b16 %v418
        %v606 = vunpack.c.h.b16 %v418
        %v607 = vunpack.c.l.b16 %v419
        %v608 = vunpack.c.h.b16 %v419
        %v609 = vunpack.c.l.b16 %v420
        %v610 = vunpack.c.h.b16 %v420
        %v611 = vunpack.c.l.b16 %v421
        %v612 = vunpack.c.h.b16 %v421
        %v613 = vunpack.c.l.b16 %v422
        %v614 = vunpack.c.h.b16 %v422
        %v615 = vunpack.c.l.b16 %v423
        %v616 = vunpack.c.h.b16 %v423
        %v617 = vunpack.c.l.b16 %v424
        %v618 = vunpack.c.h.b16 %v424
        %v619 = vunpack.c.l.b16 %v425
        %v620 = vunpack.c.h.b16 %v425
        %v621 = vunpack.c.l.b16 %v426
        %v622 = vunpack.c.h.b16 %v426
        %v623 = vunpack.c.l.b16 %v427
        %v624 = vunpack.c.h.b16 %v427
        %v625 = vunpack.c.l.b16 %v428
        %v626 = vunpack.c.h.b16 %v428
        %v627 = vunpack.c.l.b16 %v429
        %v628 = vunpack.c.h.b16 %v429
        %v629 = vunpack.c.l.b16 %v430
        %v630 = vunpack.c.h.b16 %v430
        %v631 = vunpack.c.l.b16 %v431
        %v632 = vunpack.c.h.b16 %v431
        %v633 = vunpack.c.l.b16 %v432
        %v634 = vunpack.c.h.b16 %v432
        %v635 = vunpack.c.l.b16 %v433
        %v636 = vunpack.c.h.b16 %v433
        %v637 = vunpack.c.l.b16 %v434
        %v638 = vunpack.c.h.b16 %v434
        %v639 = vpack.c.b16 %v513, %v511
        %v640 = vpack.c.b16 %v514, %v512
        %v641 = vpack.c.b16 %v517, %v515
        %v642 = vpack.c.b16 %v518, %v516
        %v643 = vpack.c.b16 %v521, %v519
        %v644 = vpack.c.b16 %v522, %v520
        %v645 = vpack.c.b16 %v525, %v523
        %v646 = vpack.c.b16 %v526, %v524
        %v647 = vpack.c.b16 %v529, %v527
        %v648 = vpack.c.b16 %v530, %v528
        %v649 = vpack.c.b16 %v533, %v531
        %v650 = vpack.c.b16 %v534, %v532
        %v651 = vpack.c.b16 %v537, %v535
        %v652 = vpack.c.b16 %v538, %v536
        %v653 = vpack.c.b16 %v541, %v539
        %v654 = vpack.c.b16 %v542, %v540
        %v655 = vpack.c.b16 %v545, %v543
        %v656 = vpack.c.b16 %v546, %v544
        %v657 = vpack.c.b16 %v549, %v547
        %v658 = vpack.c.b16 %v550, %v548
        %v659 = vpack.c.b16 %v553, %v551
        %v660 = vpack.c.b16 %v554, %v552
        %v661 = vpack.c.b16 %v557, %v555
        %v662 = vpack.c.b16 %v558, %v556
        %v663 = vpack.c.b16 %v561, %v559
        %v664 = vpack.c.b16 %v562, %v560
        %v665 = vpack.c.b16 %v565, %v563
        %v666 = vpack.c.b16 %v566, %v564
        %v667 = vpack.c.b16 %v569, %v567
        %v668 = vpack.c.b16 %v570, %v568
        %v669 = vpack.c.b16 %v573, %v571
        %v670 = vpack.c.b16 %v574, %v572
        %v671 = vpack.c.b16 %v577, %v575
        %v672 = vpack.c.b16 %v578, %v576
        %v673 = vpack.c.b16 %v581, %v579
        %v674 = vpack.c.b16 %v582, %v580
        %v675 = vpack.c.b16 %v585, %v583
        %v676 = vpack.c.b16 %v586, %v584
        %v677 = vpack.c.b16 %v589, %v587
        %v678 = vpack.c.b16 %v590, %v588
        %v679 = vpack.c.b16 %v593, %v591
        %v680 = vpack.c.b16 %v594, %v592
        %v681 = vpack.c.b16 %v597, %v595
        %v682 = vpack.c.b16 %v598, %v596
        %v683 = vpack.c.b16 %v601, %v599
        %v684 = vpack.c.b16 %v602, %v600
        %v685 = vpack.c.b16 %v605, %v603
        %v686 = vpack.c.b16 %v606, %v604
        %v687 = vpack.c.b16 %v609, %v607
        %v688 = vpack.c.b16 %v610, %v608
        %v689 = vpack.c.b16 %v613, %v611
        %v690 = vpack.c.b16 %v614, %v612
        %v691 = vpack.c.b16 %v617, %v615
        %v692 = vpack.c.b16 %v618, %v616
        %v693 = vpack.c.b16 %v621, %v619
        %v694 = vpack.c.b16 %v622, %v620
        %v695 = vpack.c.b16 %v625, %v623
        %v696 = vpack.c.b16 %v626, %v624
        %v697 = vpack.c.b16 %v629, %v627
        %v698 = vpack.c.b16 %v630, %v628
        %v699 = vpack.c.b16 %v633, %v631
        %v700 = vpack.c.b16 %v634, %v632
        %v701 = vpack.c.b16 %v637, %v635
        %v702 = vpack.c.b16 %v638, %v636
        %767 = vmatprep.subr.bf16.mxu0 %v640
        %768 = vmatpush1.bf16.msra.mxu0 %v639
        %769 = vmatprep.subr.bf16.mxu0 %v642
        %770 = vmatpush1.bf16.msra.mxu0 %v641
        %771 = vmatprep.subr.bf16.mxu0 %v644
        %772 = vmatpush1.bf16.msra.mxu0 %v643
        %773 = vmatprep.subr.bf16.mxu0 %v646
        %774 = vmatpush1.bf16.msra.mxu0 %v645
        %775 = vmatprep.subr.bf16.mxu0 %v648
        %776 = vmatpush1.bf16.msra.mxu0 %v647
        %777 = vmatprep.subr.bf16.mxu0 %v650
        %778 = vmatpush1.bf16.msra.mxu0 %v649
        %779 = vmatprep.subr.bf16.mxu0 %v652
        %780 = vmatpush1.bf16.msra.mxu0 %v651
        %781 = vmatprep.subr.bf16.mxu0 %v654
        %782 = vmatpush1.bf16.msra.mxu0 %v653
        %783 = vmatprep.subr.bf16.mxu0 %v656
        %784 = vmatpush1.bf16.msra.mxu0 %v655
        %785 = vmatprep.subr.bf16.mxu0 %v658
        %786 = vmatpush1.bf16.msra.mxu0 %v657
        %787 = vmatprep.subr.bf16.mxu0 %v660
        %788 = vmatpush1.bf16.msra.mxu0 %v659
        %789 = vmatprep.subr.bf16.mxu0 %v662
        %790 = vmatpush1.bf16.msra.mxu0 %v661
        %791 = vmatprep.subr.bf16.mxu0 %v664
        %792 = vmatpush1.bf16.msra.mxu0 %v663
        %793 = vmatprep.subr.bf16.mxu0 %v666
        %794 = vmatpush1.bf16.msra.mxu0 %v665
        %795 = vmatprep.subr.bf16.mxu0 %v668
        %796 = vmatpush1.bf16.msra.mxu0 %v667
        %797 = vmatprep.subr.bf16.mxu0 %v670
        %798 = vmatpush1.bf16.msra.mxu0 %v669
        %799 = vmatprep.mubr.bf16.mxu0 %v340
        %800 = vmatmul.mubr.bf16.gmra.mrb[0].mxu0 %v339
        %v801 = vpop.f32.mrb[0].mxu0
        %v802 = vadd.f32 %v440, %v801
        %v803 = vpop.f32.mrb[0].mxu0
        %v804 = vadd.f32 %v444, %v803
        %v805 = vpop.f32.mrb[0].mxu0
        %v806 = vadd.f32 %v440, %v805
        %v807 = vpop.f32.mrb[0].mxu0
        %v808 = vadd.f32 %v444, %v807
        %809 = vmatprep.mubr.bf16.mxu0 %v344
        %810 = vmatmul.mubr.bf16.gmra.mrb[0].mxu0 %v343
        %v811 = vpop.f32.mrb[0].mxu0
        %v812 = vadd.f32 %v440, %v811
        %v813 = vpop.f32.mrb[0].mxu0
        %v814 = vadd.f32 %v444, %v813
        %v815 = vpop.f32.mrb[0].mxu0
        %v816 = vadd.f32 %v440, %v815
        %v817 = vpop.f32.mrb[0].mxu0
        %v818 = vadd.f32 %v444, %v817
        %819 = vmatprep.mubr.bf16.mxu0 %v348
        %820 = vmatmul.mubr.bf16.gmra.mrb[0].mxu0 %v347
        %v821 = vpop.f32.mrb[0].mxu0
        %v822 = vadd.f32 %v440, %v821
        %v823 = vpop.f32.mrb[0].mxu0
        %v824 = vadd.f32 %v444, %v823
        %v825 = vpop.f32.mrb[0].mxu0
        %v826 = vadd.f32 %v440, %v825
        %v827 = vpop.f32.mrb[0].mxu0
        %v828 = vadd.f32 %v444, %v827
        %829 = vmatprep.mubr.bf16.mxu0 %v352
        %830 = vmatmul.mubr.bf16.gmra.mrb[0].mxu0 %v351
        %v831 = vpop.f32.mrb[0].mxu0
        %v832 = vadd.f32 %v440, %v831
        %v833 = vpop.f32.mrb[0].mxu0
        %v834 = vadd.f32 %v444, %v833
        %v835 = vpop.f32.mrb[0].mxu0
        %v836 = vadd.f32 %v440, %v835
        %v837 = vpop.f32.mrb[0].mxu0
        %v838 = vadd.f32 %v444, %v837
        %839 = vmatprep.mubr.bf16.mxu0 %v356
        %840 = vmatmul.mubr.bf16.gmra.mrb[0].mxu0 %v355
        %v841 = vpop.f32.mrb[0].mxu0
        %v842 = vadd.f32 %v440, %v841
        %v843 = vpop.f32.mrb[0].mxu0
        %v844 = vadd.f32 %v444, %v843
        %v845 = vpop.f32.mrb[0].mxu0
        %v846 = vadd.f32 %v440, %v845
        %v847 = vpop.f32.mrb[0].mxu0
        %v848 = vadd.f32 %v444, %v847
        %849 = vmatprep.mubr.bf16.mxu0 %v360
        %850 = vmatmul.mubr.bf16.gmra.mrb[0].mxu0 %v359
        %v851 = vpop.f32.mrb[0].mxu0
        %v852 = vadd.f32 %v440, %v851
        %v853 = vpop.f32.mrb[0].mxu0
        %v854 = vadd.f32 %v444, %v853
        %v855 = vpop.f32.mrb[0].mxu0
        %v856 = vadd.f32 %v440, %v855
        %v857 = vpop.f32.mrb[0].mxu0
        %v858 = vadd.f32 %v444, %v857
        %859 = vmatprep.mubr.bf16.mxu0 %v364
        %860 = vmatmul.mubr.bf16.gmra.mrb[0].mxu0 %v363
        %v861 = vpop.f32.mrb[0].mxu0
        %v862 = vadd.f32 %v440, %v861
        %v863 = vpop.f32.mrb[0].mxu0
        %v864 = vadd.f32 %v444, %v863
        %v865 = vpop.f32.mrb[0].mxu0
        %v866 = vadd.f32 %v440, %v865
        %v867 = vpop.f32.mrb[0].mxu0
        %v868 = vadd.f32 %v444, %v867
        %869 = vmatprep.mubr.bf16.mxu0 %v368
        %870 = vmatmul.mubr.bf16.gmra.mrb[0].mxu0 %v367
        %v871 = vpop.f32.mrb[0].mxu0
        %v872 = vadd.f32 %v440, %v871
        %v873 = vpop.f32.mrb[0].mxu0
        %v874 = vadd.f32 %v444, %v873
        %v875 = vpop.f32.mrb[0].mxu0
        %v876 = vadd.f32 %v440, %v875
        %v877 = vpop.f32.mrb[0].mxu0
        %v878 = vadd.f32 %v444, %v877
        %879 = vdwg.mxu0
        %880 = vmatprep.subr.bf16.mxu0 %v672
        %881 = vmatpush1.bf16.msra.mxu0 %v671
        %882 = vmatprep.subr.bf16.mxu0 %v674
        %883 = vmatpush1.bf16.msra.mxu0 %v673
        %884 = vmatprep.subr.bf16.mxu0 %v676
        %885 = vmatpush1.bf16.msra.mxu0 %v675
        %886 = vmatprep.subr.bf16.mxu0 %v678
        %887 = vmatpush1.bf16.msra.mxu0 %v677
        %888 = vmatprep.subr.bf16.mxu0 %v680
        %889 = vmatpush1.bf16.msra.mxu0 %v679
        %890 = vmatprep.subr.bf16.mxu0 %v682
        %891 = vmatpush1.bf16.msra.mxu0 %v681
        %892 = vmatprep.subr.bf16.mxu0 %v684
        %893 = vmatpush1.bf16.msra.mxu0 %v683
        %894 = vmatprep.subr.bf16.mxu0 %v686
        %895 = vmatpush1.bf16.msra.mxu0 %v685
        %896 = vmatprep.subr.bf16.mxu0 %v688
        %897 = vmatpush1.bf16.msra.mxu0 %v687
        %898 = vmatprep.subr.bf16.mxu0 %v690
        %899 = vmatpush1.bf16.msra.mxu0 %v689
        %900 = vmatprep.subr.bf16.mxu0 %v692
        %901 = vmatpush1.bf16.msra.mxu0 %v691
        %902 = vmatprep.subr.bf16.mxu0 %v694
        %903 = vmatpush1.bf16.msra.mxu0 %v693
        %904 = vmatprep.subr.bf16.mxu0 %v696
        %905 = vmatpush1.bf16.msra.mxu0 %v695
        %906 = vmatprep.subr.bf16.mxu0 %v698
        %907 = vmatpush1.bf16.msra.mxu0 %v697
        %908 = vmatprep.subr.bf16.mxu0 %v700
        %909 = vmatpush1.bf16.msra.mxu0 %v699
        %910 = vmatprep.subr.bf16.mxu0 %v702
        %911 = vmatpush1.bf16.msra.mxu0 %v701
        %912 = vmatprep.mubr.bf16.mxu0 %v342
        %913 = vmatmul.mubr.bf16.gmra.mrb[0].mxu0 %v341
        %v914 = vpop.f32.mrb[0].mxu0
        %v915 = vadd.f32 %v802, %v914
        %v916 = vpop.f32.mrb[0].mxu0
        %v917 = vadd.f32 %v804, %v916
        %v918 = vpop.f32.mrb[0].mxu0
        %v919 = vadd.f32 %v806, %v918
        %v920 = vpop.f32.mrb[0].mxu0
        %v921 = vadd.f32 %v808, %v920
        %922 = vmatprep.mubr.bf16.mxu0 %v346
        %923 = vmatmul.mubr.bf16.gmra.mrb[0].mxu0 %v345
        %v924 = vpop.f32.mrb[0].mxu0
        %v925 = vadd.f32 %v812, %v924
        %v926 = vpop.f32.mrb[0].mxu0
        %v927 = vadd.f32 %v814, %v926
        %v928 = vpop.f32.mrb[0].mxu0
        %v929 = vadd.f32 %v816, %v928
        %v930 = vpop.f32.mrb[0].mxu0
        %v931 = vadd.f32 %v818, %v930
        %932 = vmatprep.mubr.bf16.mxu0 %v350
        %933 = vmatmul.mubr.bf16.gmra.mrb[0].mxu0 %v349
        %v934 = vpop.f32.mrb[0].mxu0
        %v935 = vadd.f32 %v822, %v934
        %v936 = vpop.f32.mrb[0].mxu0
        %v937 = vadd.f32 %v824, %v936
        %v938 = vpop.f32.mrb[0].mxu0
        %v939 = vadd.f32 %v826, %v938
        %v940 = vpop.f32.mrb[0].mxu0
        %v941 = vadd.f32 %v828, %v940
        %942 = vmatprep.mubr.bf16.mxu0 %v354
        %943 = vmatmul.mubr.bf16.gmra.mrb[0].mxu0 %v353
        %v944 = vpop.f32.mrb[0].mxu0
        %v945 = vadd.f32 %v832, %v944
        %v946 = vpop.f32.mrb[0].mxu0
        %v947 = vadd.f32 %v834, %v946
        %v948 = vpop.f32.mrb[0].mxu0
        %v949 = vadd.f32 %v836, %v948
        %v950 = vpop.f32.mrb[0].mxu0
        %v951 = vadd.f32 %v838, %v950
        %952 = vmatprep.mubr.bf16.mxu0 %v358
        %953 = vmatmul.mubr.bf16.gmra.mrb[0].mxu0 %v357
        %v954 = vpop.f32.mrb[0].mxu0
        %v955 = vadd.f32 %v842, %v954
        %v956 = vpop.f32.mrb[0].mxu0
        %v957 = vadd.f32 %v844, %v956
        %v958 = vpop.f32.mrb[0].mxu0
        %v959 = vadd.f32 %v846, %v958
        %v960 = vpop.f32.mrb[0].mxu0
        %v961 = vadd.f32 %v848, %v960
        %962 = vmatprep.mubr.bf16.mxu0 %v362
        %963 = vmatmul.mubr.bf16.gmra.mrb[0].mxu0 %v361
        %v964 = vpop.f32.mrb[0].mxu0
        %v965 = vadd.f32 %v852, %v964
        %v966 = vpop.f32.mrb[0].mxu0
        %v967 = vadd.f32 %v854, %v966
        %v968 = vpop.f32.mrb[0].mxu0
        %v969 = vadd.f32 %v856, %v968
        %v970 = vpop.f32.mrb[0].mxu0
        %v971 = vadd.f32 %v858, %v970
        %972 = vmatprep.mubr.bf16.mxu0 %v366
        %973 = vmatmul.mubr.bf16.gmra.mrb[0].mxu0 %v365
        %v974 = vpop.f32.mrb[0].mxu0
        %v975 = vadd.f32 %v862, %v974
        %v976 = vpop.f32.mrb[0].mxu0
        %v977 = vadd.f32 %v864, %v976
        %v978 = vpop.f32.mrb[0].mxu0
        %v979 = vadd.f32 %v866, %v978
        %v980 = vpop.f32.mrb[0].mxu0
        %v981 = vadd.f32 %v868, %v980
        %982 = vmatprep.mubr.bf16.mxu0 %v370
        %983 = vmatmul.mubr.bf16.gmra.mrb[0].mxu0 %v369
        %v984 = vpop.f32.mrb[0].mxu0
        %v985 = vadd.f32 %v872, %v984
        %v986 = vpop.f32.mrb[0].mxu0
        %v987 = vadd.f32 %v874, %v986
        %v988 = vpop.f32.mrb[0].mxu0
        %v989 = vadd.f32 %v876, %v988
        %v990 = vpop.f32.mrb[0].mxu0
        %v991 = vadd.f32 %v878, %v990
        %992 = vdwg.mxu0
        %v993 = vmax.f32 %v915, 0.0
        %v994 = vmax.f32 %v917, 0.0
        %v995 = vmax.f32 %v919, 0.0
        %v996 = vmax.f32 %v921, 0.0
        %v997 = vmax.f32 %v925, 0.0
        %v998 = vmax.f32 %v927, 0.0
        %v999 = vmax.f32 %v929, 0.0
        %v1000 = vmax.f32 %v931, 0.0
        %v1001 = vmax.f32 %v935, 0.0
        %v1002 = vmax.f32 %v937, 0.0
        %v1003 = vmax.f32 %v939, 0.0
        %v1004 = vmax.f32 %v941, 0.0
        %v1005 = vmax.f32 %v945, 0.0
        %v1006 = vmax.f32 %v947, 0.0
        %v1007 = vmax.f32 %v949, 0.0
        %v1008 = vmax.f32 %v951, 0.0
        %v1009 = vmax.f32 %v955, 0.0
        %v1010 = vmax.f32 %v957, 0.0
        %v1011 = vmax.f32 %v959, 0.0
        %v1012 = vmax.f32 %v961, 0.0
        %v1013 = vmax.f32 %v965, 0.0
        %v1014 = vmax.f32 %v967, 0.0
        %v1015 = vmax.f32 %v969, 0.0
        %v1016 = vmax.f32 %v971, 0.0
        %v1017 = vmax.f32 %v975, 0.0
        %v1018 = vmax.f32 %v977, 0.0
        %v1019 = vmax.f32 %v979, 0.0
        %v1020 = vmax.f32 %v981, 0.0
        %v1021 = vmax.f32 %v985, 0.0
        %v1022 = vmax.f32 %v987, 0.0
        %v1023 = vmax.f32 %v989, 0.0
        %v1024 = vmax.f32 %v991, 0.0
        %v1025 = vpack.c.bf16 %v995, %v993
        %v1026 = vpack.c.bf16 %v996, %v994
        %v1027 = vpack.c.bf16 %v999, %v997
        %v1028 = vpack.c.bf16 %v1000, %v998
        %v1029 = vpack.c.bf16 %v1003, %v1001
        %v1030 = vpack.c.bf16 %v1004, %v1002
        %v1031 = vpack.c.bf16 %v1007, %v1005
        %v1032 = vpack.c.bf16 %v1008, %v1006
        %v1033 = vpack.c.bf16 %v1011, %v1009
        %v1034 = vpack.c.bf16 %v1012, %v1010
        %v1035 = vpack.c.bf16 %v1015, %v1013
        %v1036 = vpack.c.bf16 %v1016, %v1014
        %v1037 = vpack.c.bf16 %v1019, %v1017
        %v1038 = vpack.c.bf16 %v1020, %v1018
        %v1039 = vpack.c.bf16 %v1023, %v1021
        %v1040 = vpack.c.bf16 %v1024, %v1022
        %v1041 = vld [vmem:[#allocation7] sm:$0xff]
        %v1042 = vld [vmem:[#allocation7 + $0x8] sm:$0xff]
        %v1043 = vld [vmem:[#allocation7 + $0x10] sm:$0xff]
        %v1044 = vld [vmem:[#allocation7 + $0x18] sm:$0xff]
        %v1045 = vld [vmem:[#allocation7 + $0x20] sm:$0xff]
        %v1046 = vld [vmem:[#allocation7 + $0x28] sm:$0xff]
        %v1047 = vld [vmem:[#allocation7 + $0x30] sm:$0xff]
        %v1048 = vld [vmem:[#allocation7 + $0x38] sm:$0xff]
        %v1049 = vld [vmem:[#allocation7 + $0x40] sm:$0xff]
        %v1050 = vld [vmem:[#allocation7 + $0x48] sm:$0xff]
        %v1051 = vld [vmem:[#allocation7 + $0x50] sm:$0xff]
        %v1052 = vld [vmem:[#allocation7 + $0x58] sm:$0xff]
        %v1053 = vld [vmem:[#allocation7 + $0x60] sm:$0xff]
        %v1054 = vld [vmem:[#allocation7 + $0x68] sm:$0xff]
        %v1055 = vld [vmem:[#allocation7 + $0x70] sm:$0xff]
        %v1056 = vld [vmem:[#allocation7 + $0x78] sm:$0xff]
        %v1057 = vld [vmem:[#allocation7 + $0x80] sm:$0xff]
        %v1058 = vld [vmem:[#allocation7 + $0x88] sm:$0xff]
        %v1059 = vld [vmem:[#allocation7 + $0x90] sm:$0xff]
        %v1060 = vld [vmem:[#allocation7 + $0x98] sm:$0xff]
        %v1061 = vld [vmem:[#allocation7 + $0xa0] sm:$0xff]
        %v1062 = vld [vmem:[#allocation7 + $0xa8] sm:$0xff]
        %v1063 = vld [vmem:[#allocation7 + $0xb0] sm:$0xff]
        %v1064 = vld [vmem:[#allocation7 + $0xb8] sm:$0xff]
        %v1065 = vld [vmem:[#allocation7 + $0xc0] sm:$0xff]
        %v1066 = vld [vmem:[#allocation7 + $0xc8] sm:$0xff]
        %v1067 = vld [vmem:[#allocation7 + $0xd0] sm:$0xff]
        %v1068 = vld [vmem:[#allocation7 + $0xd8] sm:$0xff]
        %v1069 = vld [vmem:[#allocation7 + $0xe0] sm:$0xff]
        %v1070 = vld [vmem:[#allocation7 + $0xe8] sm:$0xff]
        %v1071 = vld [vmem:[#allocation7 + $0xf0] sm:$0xff]
        %v1072 = vld [vmem:[#allocation7 + $0xf8] sm:$0xff]
        %v1073 = vld [vmem:[#allocation7 + $0x100] sm:$0xff]
        %v1074 = vld [vmem:[#allocation7 + $0x108] sm:$0xff]
        %v1075 = vld [vmem:[#allocation7 + $0x110] sm:$0xff]
        %v1076 = vld [vmem:[#allocation7 + $0x118] sm:$0xff]
        %v1077 = vld [vmem:[#allocation7 + $0x120] sm:$0xff]
        %v1078 = vld [vmem:[#allocation7 + $0x128] sm:$0xff]
        %v1079 = vld [vmem:[#allocation7 + $0x130] sm:$0xff]
        %v1080 = vld [vmem:[#allocation7 + $0x138] sm:$0xff]
        %v1081 = vld [vmem:[#allocation7 + $0x140] sm:$0xff]
        %v1082 = vld [vmem:[#allocation7 + $0x148] sm:$0xff]
        %v1083 = vld [vmem:[#allocation7 + $0x150] sm:$0xff]
        %v1084 = vld [vmem:[#allocation7 + $0x158] sm:$0xff]
        %v1085 = vld [vmem:[#allocation7 + $0x160] sm:$0xff]
        %v1086 = vld [vmem:[#allocation7 + $0x168] sm:$0xff]
        %v1087 = vld [vmem:[#allocation7 + $0x170] sm:$0xff]
        %v1088 = vld [vmem:[#allocation7 + $0x178] sm:$0xff]
        %v1089 = vld [vmem:[#allocation7 + $0x180] sm:$0xff]
        %v1090 = vld [vmem:[#allocation7 + $0x188] sm:$0xff]
        %v1091 = vld [vmem:[#allocation7 + $0x190] sm:$0xff]
        %v1092 = vld [vmem:[#allocation7 + $0x198] sm:$0xff]
        %v1093 = vld [vmem:[#allocation7 + $0x1a0] sm:$0xff]
        %v1094 = vld [vmem:[#allocation7 + $0x1a8] sm:$0xff]
        %v1095 = vld [vmem:[#allocation7 + $0x1b0] sm:$0xff]
        %v1096 = vld [vmem:[#allocation7 + $0x1b8] sm:$0xff]
        %v1097 = vld [vmem:[#allocation7 + $0x1c0] sm:$0xff]
        %v1098 = vld [vmem:[#allocation7 + $0x1c8] sm:$0xff]
        %v1099 = vld [vmem:[#allocation7 + $0x1d0] sm:$0xff]
        %v1100 = vld [vmem:[#allocation7 + $0x1d8] sm:$0xff]
        %v1101 = vld [vmem:[#allocation7 + $0x1e0] sm:$0xff]
        %v1102 = vld [vmem:[#allocation7 + $0x1e8] sm:$0xff]
        %v1103 = vld [vmem:[#allocation7 + $0x1f0] sm:$0xff]
        %v1104 = vld [vmem:[#allocation7 + $0x1f8] sm:$0xff]
        %v1105 = vld [vmem:[%s4] sm:$0xf]
        %v1107 = vlaneseq
        %v1108 = vshrl.u32 %v1107, 7
        %v1109 = vsub.s32 0, %v1108
        %v1110 = vrot.slane %v1105, %v1109
        %v1111 = vlaneseq
        %v1112 = vshrl.u32 %v1111, 7
        %v1113 = vsub.s32 1, %v1112
        %v1114 = vrot.slane %v1105, %v1113
        %v1115 = vlaneseq
        %v1116 = vshrl.u32 %v1115, 7
        %v1117 = vsub.s32 2, %v1116
        %v1118 = vrot.slane %v1105, %v1117
        %v1119 = vlaneseq
        %v1120 = vshrl.u32 %v1119, 7
        %v1121 = vsub.s32 3, %v1120
        %v1122 = vrot.slane %v1105, %v1121
        %v1191 = vunpack.c.l.b16 %v1041
        %v1192 = vunpack.c.h.b16 %v1041
        %v1193 = vunpack.c.l.b16 %v1042
        %v1194 = vunpack.c.h.b16 %v1042
        %v1195 = vunpack.c.l.b16 %v1043
        %v1196 = vunpack.c.h.b16 %v1043
        %v1197 = vunpack.c.l.b16 %v1044
        %v1198 = vunpack.c.h.b16 %v1044
        %v1199 = vunpack.c.l.b16 %v1045
        %v1200 = vunpack.c.h.b16 %v1045
        %v1201 = vunpack.c.l.b16 %v1046
        %v1202 = vunpack.c.h.b16 %v1046
        %v1203 = vunpack.c.l.b16 %v1047
        %v1204 = vunpack.c.h.b16 %v1047
        %v1205 = vunpack.c.l.b16 %v1048
        %v1206 = vunpack.c.h.b16 %v1048
        %v1207 = vunpack.c.l.b16 %v1049
        %v1208 = vunpack.c.h.b16 %v1049
        %v1209 = vunpack.c.l.b16 %v1050
        %v1210 = vunpack.c.h.b16 %v1050
        %v1211 = vunpack.c.l.b16 %v1051
        %v1212 = vunpack.c.h.b16 %v1051
        %v1213 = vunpack.c.l.b16 %v1052
        %v1214 = vunpack.c.h.b16 %v1052
        %v1215 = vunpack.c.l.b16 %v1053
        %v1216 = vunpack.c.h.b16 %v1053
        %v1217 = vunpack.c.l.b16 %v1054
        %v1218 = vunpack.c.h.b16 %v1054
        %v1219 = vunpack.c.l.b16 %v1055
        %v1220 = vunpack.c.h.b16 %v1055
        %v1221 = vunpack.c.l.b16 %v1056
        %v1222 = vunpack.c.h.b16 %v1056
        %v1223 = vunpack.c.l.b16 %v1057
        %v1224 = vunpack.c.h.b16 %v1057
        %v1225 = vunpack.c.l.b16 %v1058
        %v1226 = vunpack.c.h.b16 %v1058
        %v1227 = vunpack.c.l.b16 %v1059
        %v1228 = vunpack.c.h.b16 %v1059
        %v1229 = vunpack.c.l.b16 %v1060
        %v1230 = vunpack.c.h.b16 %v1060
        %v1231 = vunpack.c.l.b16 %v1061
        %v1232 = vunpack.c.h.b16 %v1061
        %v1233 = vunpack.c.l.b16 %v1062
        %v1234 = vunpack.c.h.b16 %v1062
        %v1235 = vunpack.c.l.b16 %v1063
        %v1236 = vunpack.c.h.b16 %v1063
        %v1237 = vunpack.c.l.b16 %v1064
        %v1238 = vunpack.c.h.b16 %v1064
        %v1239 = vunpack.c.l.b16 %v1065
        %v1240 = vunpack.c.h.b16 %v1065
        %v1241 = vunpack.c.l.b16 %v1066
        %v1242 = vunpack.c.h.b16 %v1066
        %v1243 = vunpack.c.l.b16 %v1067
        %v1244 = vunpack.c.h.b16 %v1067
        %v1245 = vunpack.c.l.b16 %v1068
        %v1246 = vunpack.c.h.b16 %v1068
        %v1247 = vunpack.c.l.b16 %v1069
        %v1248 = vunpack.c.h.b16 %v1069
        %v1249 = vunpack.c.l.b16 %v1070
        %v1250 = vunpack.c.h.b16 %v1070
        %v1251 = vunpack.c.l.b16 %v1071
        %v1252 = vunpack.c.h.b16 %v1071
        %v1253 = vunpack.c.l.b16 %v1072
        %v1254 = vunpack.c.h.b16 %v1072
        %v1255 = vunpack.c.l.b16 %v1073
        %v1256 = vunpack.c.h.b16 %v1073
        %v1257 = vunpack.c.l.b16 %v1074
        %v1258 = vunpack.c.h.b16 %v1074
        %v1259 = vunpack.c.l.b16 %v1075
        %v1260 = vunpack.c.h.b16 %v1075
        %v1261 = vunpack.c.l.b16 %v1076
        %v1262 = vunpack.c.h.b16 %v1076
        %v1263 = vunpack.c.l.b16 %v1077
        %v1264 = vunpack.c.h.b16 %v1077
        %v1265 = vunpack.c.l.b16 %v1078
        %v1266 = vunpack.c.h.b16 %v1078
        %v1267 = vunpack.c.l.b16 %v1079
        %v1268 = vunpack.c.h.b16 %v1079
        %v1269 = vunpack.c.l.b16 %v1080
        %v1270 = vunpack.c.h.b16 %v1080
        %v1271 = vunpack.c.l.b16 %v1081
        %v1272 = vunpack.c.h.b16 %v1081
        %v1273 = vunpack.c.l.b16 %v1082
        %v1274 = vunpack.c.h.b16 %v1082
        %v1275 = vunpack.c.l.b16 %v1083
        %v1276 = vunpack.c.h.b16 %v1083
        %v1277 = vunpack.c.l.b16 %v1084
        %v1278 = vunpack.c.h.b16 %v1084
        %v1279 = vunpack.c.l.b16 %v1085
        %v1280 = vunpack.c.h.b16 %v1085
        %v1281 = vunpack.c.l.b16 %v1086
        %v1282 = vunpack.c.h.b16 %v1086
        %v1283 = vunpack.c.l.b16 %v1087
        %v1284 = vunpack.c.h.b16 %v1087
        %v1285 = vunpack.c.l.b16 %v1088
        %v1286 = vunpack.c.h.b16 %v1088
        %v1287 = vunpack.c.l.b16 %v1089
        %v1288 = vunpack.c.h.b16 %v1089
        %v1289 = vunpack.c.l.b16 %v1090
        %v1290 = vunpack.c.h.b16 %v1090
        %v1291 = vunpack.c.l.b16 %v1091
        %v1292 = vunpack.c.h.b16 %v1091
        %v1293 = vunpack.c.l.b16 %v1092
        %v1294 = vunpack.c.h.b16 %v1092
        %v1295 = vunpack.c.l.b16 %v1093
        %v1296 = vunpack.c.h.b16 %v1093
        %v1297 = vunpack.c.l.b16 %v1094
        %v1298 = vunpack.c.h.b16 %v1094
        %v1299 = vunpack.c.l.b16 %v1095
        %v1300 = vunpack.c.h.b16 %v1095
        %v1301 = vunpack.c.l.b16 %v1096
        %v1302 = vunpack.c.h.b16 %v1096
        %v1303 = vunpack.c.l.b16 %v1097
        %v1304 = vunpack.c.h.b16 %v1097
        %v1305 = vunpack.c.l.b16 %v1098
        %v1306 = vunpack.c.h.b16 %v1098
        %v1307 = vunpack.c.l.b16 %v1099
        %v1308 = vunpack.c.h.b16 %v1099
        %v1309 = vunpack.c.l.b16 %v1100
        %v1310 = vunpack.c.h.b16 %v1100
        %v1311 = vunpack.c.l.b16 %v1101
        %v1312 = vunpack.c.h.b16 %v1101
        %v1313 = vunpack.c.l.b16 %v1102
        %v1314 = vunpack.c.h.b16 %v1102
        %v1315 = vunpack.c.l.b16 %v1103
        %v1316 = vunpack.c.h.b16 %v1103
        %v1317 = vunpack.c.l.b16 %v1104
        %v1318 = vunpack.c.h.b16 %v1104
        %v1319 = vpack.c.b16 %v1195, %v1191
        %v1320 = vpack.c.b16 %v1196, %v1192
        %v1321 = vpack.c.b16 %v1197, %v1193
        %v1322 = vpack.c.b16 %v1198, %v1194
        %v1323 = vpack.c.b16 %v1203, %v1199
        %v1324 = vpack.c.b16 %v1204, %v1200
        %v1325 = vpack.c.b16 %v1205, %v1201
        %v1326 = vpack.c.b16 %v1206, %v1202
        %v1327 = vpack.c.b16 %v1211, %v1207
        %v1328 = vpack.c.b16 %v1212, %v1208
        %v1329 = vpack.c.b16 %v1213, %v1209
        %v1330 = vpack.c.b16 %v1214, %v1210
        %v1331 = vpack.c.b16 %v1219, %v1215
        %v1332 = vpack.c.b16 %v1220, %v1216
        %v1333 = vpack.c.b16 %v1221, %v1217
        %v1334 = vpack.c.b16 %v1222, %v1218
        %v1335 = vpack.c.b16 %v1227, %v1223
        %v1336 = vpack.c.b16 %v1228, %v1224
        %v1337 = vpack.c.b16 %v1229, %v1225
        %v1338 = vpack.c.b16 %v1230, %v1226
        %v1339 = vpack.c.b16 %v1235, %v1231
        %v1340 = vpack.c.b16 %v1236, %v1232
        %v1341 = vpack.c.b16 %v1237, %v1233
        %v1342 = vpack.c.b16 %v1238, %v1234
        %v1343 = vpack.c.b16 %v1243, %v1239
        %v1344 = vpack.c.b16 %v1244, %v1240
        %v1345 = vpack.c.b16 %v1245, %v1241
        %v1346 = vpack.c.b16 %v1246, %v1242
        %v1347 = vpack.c.b16 %v1251, %v1247
        %v1348 = vpack.c.b16 %v1252, %v1248
        %v1349 = vpack.c.b16 %v1253, %v1249
        %v1350 = vpack.c.b16 %v1254, %v1250
        %v1351 = vpack.c.b16 %v1259, %v1255
        %v1352 = vpack.c.b16 %v1260, %v1256
        %v1353 = vpack.c.b16 %v1261, %v1257
        %v1354 = vpack.c.b16 %v1262, %v1258
        %v1355 = vpack.c.b16 %v1267, %v1263
        %v1356 = vpack.c.b16 %v1268, %v1264
        %v1357 = vpack.c.b16 %v1269, %v1265
        %v1358 = vpack.c.b16 %v1270, %v1266
        %v1359 = vpack.c.b16 %v1275, %v1271
        %v1360 = vpack.c.b16 %v1276, %v1272
        %v1361 = vpack.c.b16 %v1277, %v1273
        %v1362 = vpack.c.b16 %v1278, %v1274
        %v1363 = vpack.c.b16 %v1283, %v1279
        %v1364 = vpack.c.b16 %v1284, %v1280
        %v1365 = vpack.c.b16 %v1285, %v1281
        %v1366 = vpack.c.b16 %v1286, %v1282
        %v1367 = vpack.c.b16 %v1291, %v1287
        %v1368 = vpack.c.b16 %v1292, %v1288
        %v1369 = vpack.c.b16 %v1293, %v1289
        %v1370 = vpack.c.b16 %v1294, %v1290
        %v1371 = vpack.c.b16 %v1299, %v1295
        %v1372 = vpack.c.b16 %v1300, %v1296
        %v1373 = vpack.c.b16 %v1301, %v1297
        %v1374 = vpack.c.b16 %v1302, %v1298
        %v1375 = vpack.c.b16 %v1307, %v1303
        %v1376 = vpack.c.b16 %v1308, %v1304
        %v1377 = vpack.c.b16 %v1309, %v1305
        %v1378 = vpack.c.b16 %v1310, %v1306
        %v1379 = vpack.c.b16 %v1315, %v1311
        %v1380 = vpack.c.b16 %v1316, %v1312
        %v1381 = vpack.c.b16 %v1317, %v1313
        %v1382 = vpack.c.b16 %v1318, %v1314
        %1447 = vmatprep.subr.bf16.mxu0 %v1320
        %1448 = vmatpush1.bf16.msra.mxu0 %v1319
        %1449 = vmatprep.subr.bf16.mxu0 %v1324
        %1450 = vmatpush1.bf16.msra.mxu0 %v1323
        %1451 = vmatprep.subr.bf16.mxu0 %v1328
        %1452 = vmatpush1.bf16.msra.mxu0 %v1327
        %1453 = vmatprep.subr.bf16.mxu0 %v1332
        %1454 = vmatpush1.bf16.msra.mxu0 %v1331
        %1455 = vmatprep.subr.bf16.mxu0 %v1336
        %1456 = vmatpush1.bf16.msra.mxu0 %v1335
        %1457 = vmatprep.subr.bf16.mxu0 %v1340
        %1458 = vmatpush1.bf16.msra.mxu0 %v1339
        %1459 = vmatprep.subr.bf16.mxu0 %v1344
        %1460 = vmatpush1.bf16.msra.mxu0 %v1343
        %1461 = vmatprep.subr.bf16.mxu0 %v1348
        %1462 = vmatpush1.bf16.msra.mxu0 %v1347
        %1463 = vmatprep.subr.bf16.mxu0 %v1352
        %1464 = vmatpush1.bf16.msra.mxu0 %v1351
        %1465 = vmatprep.subr.bf16.mxu0 %v1356
        %1466 = vmatpush1.bf16.msra.mxu0 %v1355
        %1467 = vmatprep.subr.bf16.mxu0 %v1360
        %1468 = vmatpush1.bf16.msra.mxu0 %v1359
        %1469 = vmatprep.subr.bf16.mxu0 %v1364
        %1470 = vmatpush1.bf16.msra.mxu0 %v1363
        %1471 = vmatprep.subr.bf16.mxu0 %v1368
        %1472 = vmatpush1.bf16.msra.mxu0 %v1367
        %1473 = vmatprep.subr.bf16.mxu0 %v1372
        %1474 = vmatpush1.bf16.msra.mxu0 %v1371
        %1475 = vmatprep.subr.bf16.mxu0 %v1376
        %1476 = vmatpush1.bf16.msra.mxu0 %v1375
        %1477 = vmatprep.subr.bf16.mxu0 %v1380
        %1478 = vmatpush1.bf16.msra.mxu0 %v1379
        %1479 = vmatprep.mubr.bf16.mxu0 %v1026
        %1480 = vmatmul.mubr.bf16.gmra.mrb[0].mxu0 %v1025
        %v1481 = vpop.f32.mrb[0].mxu0
        %v1482 = vadd.f32 %v1110, %v1481
        %v1483 = vpop.f32.mrb[0].mxu0
        %v1484 = vadd.f32 %v1114, %v1483
        %v1485 = vpop.f32.mrb[0].mxu0
        %v1486 = vadd.f32 %v1110, %v1485
        %v1487 = vpop.f32.mrb[0].mxu0
        %v1488 = vadd.f32 %v1114, %v1487
        %1489 = vmatprep.mubr.bf16.mxu0 %v1028
        %1490 = vmatmul.mubr.bf16.gmra.mrb[0].mxu0 %v1027
        %v1491 = vpop.f32.mrb[0].mxu0
        %v1492 = vadd.f32 %v1110, %v1491
        %v1493 = vpop.f32.mrb[0].mxu0
        %v1494 = vadd.f32 %v1114, %v1493
        %v1495 = vpop.f32.mrb[0].mxu0
        %v1496 = vadd.f32 %v1110, %v1495
        %v1497 = vpop.f32.mrb[0].mxu0
        %v1498 = vadd.f32 %v1114, %v1497
        %1499 = vmatprep.mubr.bf16.mxu0 %v1030
        %1500 = vmatmul.mubr.bf16.gmra.mrb[0].mxu0 %v1029
        %v1501 = vpop.f32.mrb[0].mxu0
        %v1502 = vadd.f32 %v1110, %v1501
        %v1503 = vpop.f32.mrb[0].mxu0
        %v1504 = vadd.f32 %v1114, %v1503
        %v1505 = vpop.f32.mrb[0].mxu0
        %v1506 = vadd.f32 %v1110, %v1505
        %v1507 = vpop.f32.mrb[0].mxu0
        %v1508 = vadd.f32 %v1114, %v1507
        %1509 = vmatprep.mubr.bf16.mxu0 %v1032
        %1510 = vmatmul.mubr.bf16.gmra.mrb[0].mxu0 %v1031
        %v1511 = vpop.f32.mrb[0].mxu0
        %v1512 = vadd.f32 %v1110, %v1511
        %v1513 = vpop.f32.mrb[0].mxu0
        %v1514 = vadd.f32 %v1114, %v1513
        %v1515 = vpop.f32.mrb[0].mxu0
        %v1516 = vadd.f32 %v1110, %v1515
        %v1517 = vpop.f32.mrb[0].mxu0
        %v1518 = vadd.f32 %v1114, %v1517
        %1519 = vmatprep.mubr.bf16.mxu0 %v1034
        %1520 = vmatmul.mubr.bf16.gmra.mrb[0].mxu0 %v1033
        %v1521 = vpop.f32.mrb[0].mxu0
        %v1522 = vadd.f32 %v1110, %v1521
        %v1523 = vpop.f32.mrb[0].mxu0
        %v1524 = vadd.f32 %v1114, %v1523
        %v1525 = vpop.f32.mrb[0].mxu0
        %v1526 = vadd.f32 %v1110, %v1525
        %v1527 = vpop.f32.mrb[0].mxu0
        %v1528 = vadd.f32 %v1114, %v1527
        %1529 = vmatprep.mubr.bf16.mxu0 %v1036
        %1530 = vmatmul.mubr.bf16.gmra.mrb[0].mxu0 %v1035
        %v1531 = vpop.f32.mrb[0].mxu0
        %v1532 = vadd.f32 %v1110, %v1531
        %v1533 = vpop.f32.mrb[0].mxu0
        %v1534 = vadd.f32 %v1114, %v1533
        %v1535 = vpop.f32.mrb[0].mxu0
        %v1536 = vadd.f32 %v1110, %v1535
        %v1537 = vpop.f32.mrb[0].mxu0
        %v1538 = vadd.f32 %v1114, %v1537
        %1539 = vmatprep.mubr.bf16.mxu0 %v1038
        %1540 = vmatmul.mubr.bf16.gmra.mrb[0].mxu0 %v1037
        %v1541 = vpop.f32.mrb[0].mxu0
        %v1542 = vadd.f32 %v1110, %v1541
        %v1543 = vpop.f32.mrb[0].mxu0
        %v1544 = vadd.f32 %v1114, %v1543
        %v1545 = vpop.f32.mrb[0].mxu0
        %v1546 = vadd.f32 %v1110, %v1545
        %v1547 = vpop.f32.mrb[0].mxu0
        %v1548 = vadd.f32 %v1114, %v1547
        %1549 = vmatprep.mubr.bf16.mxu0 %v1040
        %1550 = vmatmul.mubr.bf16.gmra.mrb[0].mxu0 %v1039
        %v1551 = vpop.f32.mrb[0].mxu0
        %v1552 = vadd.f32 %v1110, %v1551
        %v1553 = vpop.f32.mrb[0].mxu0
        %v1554 = vadd.f32 %v1114, %v1553
        %v1555 = vpop.f32.mrb[0].mxu0
        %v1556 = vadd.f32 %v1110, %v1555
        %v1557 = vpop.f32.mrb[0].mxu0
        %v1558 = vadd.f32 %v1114, %v1557
        %1559 = vdwg.mxu0
        %1560 = vmatprep.subr.bf16.mxu0 %v1322
        %1561 = vmatpush1.bf16.msra.mxu0 %v1321
        %1562 = vmatprep.subr.bf16.mxu0 %v1326
        %1563 = vmatpush1.bf16.msra.mxu0 %v1325
        %1564 = vmatprep.subr.bf16.mxu0 %v1330
        %1565 = vmatpush1.bf16.msra.mxu0 %v1329
        %1566 = vmatprep.subr.bf16.mxu0 %v1334
        %1567 = vmatpush1.bf16.msra.mxu0 %v1333
        %1568 = vmatprep.subr.bf16.mxu0 %v1338
        %1569 = vmatpush1.bf16.msra.mxu0 %v1337
        %1570 = vmatprep.subr.bf16.mxu0 %v1342
        %1571 = vmatpush1.bf16.msra.mxu0 %v1341
        %1572 = vmatprep.subr.bf16.mxu0 %v1346
        %1573 = vmatpush1.bf16.msra.mxu0 %v1345
        %1574 = vmatprep.subr.bf16.mxu0 %v1350
        %1575 = vmatpush1.bf16.msra.mxu0 %v1349
        %1576 = vmatprep.subr.bf16.mxu0 %v1354
        %1577 = vmatpush1.bf16.msra.mxu0 %v1353
        %1578 = vmatprep.subr.bf16.mxu0 %v1358
        %1579 = vmatpush1.bf16.msra.mxu0 %v1357
        %1580 = vmatprep.subr.bf16.mxu0 %v1362
        %1581 = vmatpush1.bf16.msra.mxu0 %v1361
        %1582 = vmatprep.subr.bf16.mxu0 %v1366
        %1583 = vmatpush1.bf16.msra.mxu0 %v1365
        %1584 = vmatprep.subr.bf16.mxu0 %v1370
        %1585 = vmatpush1.bf16.msra.mxu0 %v1369
        %1586 = vmatprep.subr.bf16.mxu0 %v1374
        %1587 = vmatpush1.bf16.msra.mxu0 %v1373
        %1588 = vmatprep.subr.bf16.mxu0 %v1378
        %1589 = vmatpush1.bf16.msra.mxu0 %v1377
        %1590 = vmatprep.subr.bf16.mxu0 %v1382
        %1591 = vmatpush1.bf16.msra.mxu0 %v1381
        %1592 = vmatprep.mubr.bf16.mxu0 %v1026
        %1593 = vmatmul.mubr.bf16.gmra.mrb[0].mxu0 %v1025
        %v1594 = vpop.f32.mrb[0].mxu0
        %v1595 = vadd.f32 %v1118, %v1594
        %v1596 = vpop.f32.mrb[0].mxu0
        %v1597 = vadd.f32 %v1122, %v1596
        %v1598 = vpop.f32.mrb[0].mxu0
        %v1599 = vadd.f32 %v1118, %v1598
        %v1600 = vpop.f32.mrb[0].mxu0
        %v1601 = vadd.f32 %v1122, %v1600
        %1602 = vmatprep.mubr.bf16.mxu0 %v1028
        %1603 = vmatmul.mubr.bf16.gmra.mrb[0].mxu0 %v1027
        %v1604 = vpop.f32.mrb[0].mxu0
        %v1605 = vadd.f32 %v1118, %v1604
        %v1606 = vpop.f32.mrb[0].mxu0
        %v1607 = vadd.f32 %v1122, %v1606
        %v1608 = vpop.f32.mrb[0].mxu0
        %v1609 = vadd.f32 %v1118, %v1608
        %v1610 = vpop.f32.mrb[0].mxu0
        %v1611 = vadd.f32 %v1122, %v1610
        %1612 = vmatprep.mubr.bf16.mxu0 %v1030
        %1613 = vmatmul.mubr.bf16.gmra.mrb[0].mxu0 %v1029
        %v1614 = vpop.f32.mrb[0].mxu0
        %v1615 = vadd.f32 %v1118, %v1614
        %v1616 = vpop.f32.mrb[0].mxu0
        %v1617 = vadd.f32 %v1122, %v1616
        %v1618 = vpop.f32.mrb[0].mxu0
        %v1619 = vadd.f32 %v1118, %v1618
        %v1620 = vpop.f32.mrb[0].mxu0
        %v1621 = vadd.f32 %v1122, %v1620
        %1622 = vmatprep.mubr.bf16.mxu0 %v1032
        %1623 = vmatmul.mubr.bf16.gmra.mrb[0].mxu0 %v1031
        %v1624 = vpop.f32.mrb[0].mxu0
        %v1625 = vadd.f32 %v1118, %v1624
        %v1626 = vpop.f32.mrb[0].mxu0
        %v1627 = vadd.f32 %v1122, %v1626
        %v1628 = vpop.f32.mrb[0].mxu0
        %v1629 = vadd.f32 %v1118, %v1628
        %v1630 = vpop.f32.mrb[0].mxu0
        %v1631 = vadd.f32 %v1122, %v1630
        %1632 = vmatprep.mubr.bf16.mxu0 %v1034
        %1633 = vmatmul.mubr.bf16.gmra.mrb[0].mxu0 %v1033
        %v1634 = vpop.f32.mrb[0].mxu0
        %v1635 = vadd.f32 %v1118, %v1634
        %v1636 = vpop.f32.mrb[0].mxu0
        %v1637 = vadd.f32 %v1122, %v1636
        %v1638 = vpop.f32.mrb[0].mxu0
        %v1639 = vadd.f32 %v1118, %v1638
        %v1640 = vpop.f32.mrb[0].mxu0
        %v1641 = vadd.f32 %v1122, %v1640
        %1642 = vmatprep.mubr.bf16.mxu0 %v1036
        %1643 = vmatmul.mubr.bf16.gmra.mrb[0].mxu0 %v1035
        %v1644 = vpop.f32.mrb[0].mxu0
        %v1645 = vadd.f32 %v1118, %v1644
        %v1646 = vpop.f32.mrb[0].mxu0
        %v1647 = vadd.f32 %v1122, %v1646
        %v1648 = vpop.f32.mrb[0].mxu0
        %v1649 = vadd.f32 %v1118, %v1648
        %v1650 = vpop.f32.mrb[0].mxu0
        %v1651 = vadd.f32 %v1122, %v1650
        %1652 = vmatprep.mubr.bf16.mxu0 %v1038
        %1653 = vmatmul.mubr.bf16.gmra.mrb[0].mxu0 %v1037
        %v1654 = vpop.f32.mrb[0].mxu0
        %v1655 = vadd.f32 %v1118, %v1654
        %v1656 = vpop.f32.mrb[0].mxu0
        %v1657 = vadd.f32 %v1122, %v1656
        %v1658 = vpop.f32.mrb[0].mxu0
        %v1659 = vadd.f32 %v1118, %v1658
        %v1660 = vpop.f32.mrb[0].mxu0
        %v1661 = vadd.f32 %v1122, %v1660
        %1662 = vmatprep.mubr.bf16.mxu0 %v1040
        %1663 = vmatmul.mubr.bf16.gmra.mrb[0].mxu0 %v1039
        %v1664 = vpop.f32.mrb[0].mxu0
        %v1665 = vadd.f32 %v1118, %v1664
        %v1666 = vpop.f32.mrb[0].mxu0
        %v1667 = vadd.f32 %v1122, %v1666
        %v1668 = vpop.f32.mrb[0].mxu0
        %v1669 = vadd.f32 %v1118, %v1668
        %v1670 = vpop.f32.mrb[0].mxu0
        %v1671 = vadd.f32 %v1122, %v1670
        %1672 = vdwg.mxu0
        %v1673 = vmax.f32 %v1482, 0.0
        %v1674 = vmax.f32 %v1484, 0.0
        %v1675 = vmax.f32 %v1595, 0.0
        %v1676 = vmax.f32 %v1597, 0.0
        %v1677 = vmax.f32 %v1486, 0.0
        %v1678 = vmax.f32 %v1488, 0.0
        %v1679 = vmax.f32 %v1599, 0.0
        %v1680 = vmax.f32 %v1601, 0.0
        %v1681 = vmax.f32 %v1492, 0.0
        %v1682 = vmax.f32 %v1494, 0.0
        %v1683 = vmax.f32 %v1605, 0.0
        %v1684 = vmax.f32 %v1607, 0.0
        %v1685 = vmax.f32 %v1496, 0.0
        %v1686 = vmax.f32 %v1498, 0.0
        %v1687 = vmax.f32 %v1609, 0.0
        %v1688 = vmax.f32 %v1611, 0.0
        %v1689 = vmax.f32 %v1502, 0.0
        %v1690 = vmax.f32 %v1504, 0.0
        %v1691 = vmax.f32 %v1615, 0.0
        %v1692 = vmax.f32 %v1617, 0.0
        %v1693 = vmax.f32 %v1506, 0.0
        %v1694 = vmax.f32 %v1508, 0.0
        %v1695 = vmax.f32 %v1619, 0.0
        %v1696 = vmax.f32 %v1621, 0.0
        %v1697 = vmax.f32 %v1512, 0.0
        %v1698 = vmax.f32 %v1514, 0.0
        %v1699 = vmax.f32 %v1625, 0.0
        %v1700 = vmax.f32 %v1627, 0.0
        %v1701 = vmax.f32 %v1516, 0.0
        %v1702 = vmax.f32 %v1518, 0.0
        %v1703 = vmax.f32 %v1629, 0.0
        %v1704 = vmax.f32 %v1631, 0.0
        %v1705 = vmax.f32 %v1522, 0.0
        %v1706 = vmax.f32 %v1524, 0.0
        %v1707 = vmax.f32 %v1635, 0.0
        %v1708 = vmax.f32 %v1637, 0.0
        %v1709 = vmax.f32 %v1526, 0.0
        %v1710 = vmax.f32 %v1528, 0.0
        %v1711 = vmax.f32 %v1639, 0.0
        %v1712 = vmax.f32 %v1641, 0.0
        %v1713 = vmax.f32 %v1532, 0.0
        %v1714 = vmax.f32 %v1534, 0.0
        %v1715 = vmax.f32 %v1645, 0.0
        %v1716 = vmax.f32 %v1647, 0.0
        %v1717 = vmax.f32 %v1536, 0.0
        %v1718 = vmax.f32 %v1538, 0.0
        %v1719 = vmax.f32 %v1649, 0.0
        %v1720 = vmax.f32 %v1651, 0.0
        %v1721 = vmax.f32 %v1542, 0.0
        %v1722 = vmax.f32 %v1544, 0.0
        %v1723 = vmax.f32 %v1655, 0.0
        %v1724 = vmax.f32 %v1657, 0.0
        %v1725 = vmax.f32 %v1546, 0.0
        %v1726 = vmax.f32 %v1548, 0.0
        %v1727 = vmax.f32 %v1659, 0.0
        %v1728 = vmax.f32 %v1661, 0.0
        %v1729 = vmax.f32 %v1552, 0.0
        %v1730 = vmax.f32 %v1554, 0.0
        %v1731 = vmax.f32 %v1665, 0.0
        %v1732 = vmax.f32 %v1667, 0.0
        %v1733 = vmax.f32 %v1556, 0.0
        %v1734 = vmax.f32 %v1558, 0.0
        %v1735 = vmax.f32 %v1669, 0.0
        %v1736 = vmax.f32 %v1671, 0.0
        %1737 = vst [vmem:[%s272] sm:$0xff] %v1673
        %1738 = vst [vmem:[%s272 + $0x8] sm:$0xff] %v1674
        %1739 = vst [vmem:[%s272 + $0x10] sm:$0xff] %v1675
        %1740 = vst [vmem:[%s272 + $0x18] sm:$0xff] %v1676
        %1741 = vst [vmem:[%s272 + $0x20] sm:$0xff] %v1677
        %1742 = vst [vmem:[%s272 + $0x28] sm:$0xff] %v1678
        %1743 = vst [vmem:[%s272 + $0x30] sm:$0xff] %v1679
        %1744 = vst [vmem:[%s272 + $0x38] sm:$0xff] %v1680
        %1745 = vst [vmem:[%s272 + $0x40] sm:$0xff] %v1681
        %1746 = vst [vmem:[%s272 + $0x48] sm:$0xff] %v1682
        %1747 = vst [vmem:[%s272 + $0x50] sm:$0xff] %v1683
        %1748 = vst [vmem:[%s272 + $0x58] sm:$0xff] %v1684
        %1749 = vst [vmem:[%s272 + $0x60] sm:$0xff] %v1685
        %1750 = vst [vmem:[%s272 + $0x68] sm:$0xff] %v1686
        %1751 = vst [vmem:[%s272 + $0x70] sm:$0xff] %v1687
        %1752 = vst [vmem:[%s272 + $0x78] sm:$0xff] %v1688
        %1753 = vst [vmem:[%s272 + $0x80] sm:$0xff] %v1689
        %1754 = vst [vmem:[%s272 + $0x88] sm:$0xff] %v1690
        %1755 = vst [vmem:[%s272 + $0x90] sm:$0xff] %v1691
        %1756 = vst [vmem:[%s272 + $0x98] sm:$0xff] %v1692
        %1757 = vst [vmem:[%s272 + $0xa0] sm:$0xff] %v1693
        %1758 = vst [vmem:[%s272 + $0xa8] sm:$0xff] %v1694
        %1759 = vst [vmem:[%s272 + $0xb0] sm:$0xff] %v1695
        %1760 = vst [vmem:[%s272 + $0xb8] sm:$0xff] %v1696
        %1761 = vst [vmem:[%s272 + $0xc0] sm:$0xff] %v1697
        %1762 = vst [vmem:[%s272 + $0xc8] sm:$0xff] %v1698
        %1763 = vst [vmem:[%s272 + $0xd0] sm:$0xff] %v1699
        %1764 = vst [vmem:[%s272 + $0xd8] sm:$0xff] %v1700
        %1765 = vst [vmem:[%s272 + $0xe0] sm:$0xff] %v1701
        %1766 = vst [vmem:[%s272 + $0xe8] sm:$0xff] %v1702
        %1767 = vst [vmem:[%s272 + $0xf0] sm:$0xff] %v1703
        %1768 = vst [vmem:[%s272 + $0xf8] sm:$0xff] %v1704
        %1769 = vst [vmem:[%s272 + $0x100] sm:$0xff] %v1705
        %1770 = vst [vmem:[%s272 + $0x108] sm:$0xff] %v1706
        %1771 = vst [vmem:[%s272 + $0x110] sm:$0xff] %v1707
        %1772 = vst [vmem:[%s272 + $0x118] sm:$0xff] %v1708
        %1773 = vst [vmem:[%s272 + $0x120] sm:$0xff] %v1709
        %1774 = vst [vmem:[%s272 + $0x128] sm:$0xff] %v1710
        %1775 = vst [vmem:[%s272 + $0x130] sm:$0xff] %v1711
        %1776 = vst [vmem:[%s272 + $0x138] sm:$0xff] %v1712
        %1777 = vst [vmem:[%s272 + $0x140] sm:$0xff] %v1713
        %1778 = vst [vmem:[%s272 + $0x148] sm:$0xff] %v1714
        %1779 = vst [vmem:[%s272 + $0x150] sm:$0xff] %v1715
        %1780 = vst [vmem:[%s272 + $0x158] sm:$0xff] %v1716
        %1781 = vst [vmem:[%s272 + $0x160] sm:$0xff] %v1717
        %1782 = vst [vmem:[%s272 + $0x168] sm:$0xff] %v1718
        %1783 = vst [vmem:[%s272 + $0x170] sm:$0xff] %v1719
        %1784 = vst [vmem:[%s272 + $0x178] sm:$0xff] %v1720
        %1785 = vst [vmem:[%s272 + $0x180] sm:$0xff] %v1721
        %1786 = vst [vmem:[%s272 + $0x188] sm:$0xff] %v1722
        %1787 = vst [vmem:[%s272 + $0x190] sm:$0xff] %v1723
        %1788 = vst [vmem:[%s272 + $0x198] sm:$0xff] %v1724
        %1789 = vst [vmem:[%s272 + $0x1a0] sm:$0xff] %v1725
        %1790 = vst [vmem:[%s272 + $0x1a8] sm:$0xff] %v1726
        %1791 = vst [vmem:[%s272 + $0x1b0] sm:$0xff] %v1727
        %1792 = vst [vmem:[%s272 + $0x1b8] sm:$0xff] %v1728
        %1793 = vst [vmem:[%s272 + $0x1c0] sm:$0xff] %v1729
        %1794 = vst [vmem:[%s272 + $0x1c8] sm:$0xff] %v1730
        %1795 = vst [vmem:[%s272 + $0x1d0] sm:$0xff] %v1731
        %1796 = vst [vmem:[%s272 + $0x1d8] sm:$0xff] %v1732
        %1797 = vst [vmem:[%s272 + $0x1e0] sm:$0xff] %v1733
        %1798 = vst [vmem:[%s272 + $0x1e8] sm:$0xff] %v1734
        %1799 = vst [vmem:[%s272 + $0x1f0] sm:$0xff] %v1735
        %1800 = vst [vmem:[%s272 + $0x1f8] sm:$0xff] %v1736
        %s1801 = sand.u32 %s141, 1
        %s1802 = scalar_lea.sflag [#allocation4], %s1801
        %s1803 = sand.u32 %s141, 1
        %s1804 = smul.addr %s1803, 512
        %s1805 = scalar_lea.vmem [#allocation8], %s1804
        // Predicated region
        $region53: #{tpu_custom_call.1} parent=39 // pred_check
          %p1806 = pneg %p151
        $region54: #{tpu_custom_call.1} parent=39 // pred_check_branch
          %1808 = sbr.rel (%p1806) target = $region56
        $region55: #{tpu_custom_call.1} parent=39 // pred_region
          %s1809 = smul.u32 16, %s23
          %s1811 = ssub.s32 8192, 8192
          %1812 = vsyncadd %s1802, %s1811
          %s1813 = smul.addr %s1809, 4
          %s1814 = smul.addr %s1813, 128
          %s1815 = scalar_lea.hbm %s5, %s1814
          %s1816 = sshll.u32 %s1805, 4
          %s1817 = int_to_ptr.vmem [resolvable:$true] %s1816
          %1822 = dma.vmem_to_hbm [thread:$0]  %s1817, 8192, %s1815, %s1802, 512, 512, 32
        $region56: #{tpu_custom_call.1} parent=39 // pred_fallthru
          _
      $region40: #{tpu_custom_call.1} parent=5 // pred_fallthru
        _
      %p1823 = scmp.le.s32.totalorder 2, %s18
      // Predicated region
      $region57: #{tpu_custom_call.1} parent=5 // pred_check
        %p1824 = pneg %p1823
      $region58: #{tpu_custom_call.1} parent=5 // pred_check_branch
        %1826 = sbr.rel (%p1824) target = $region60
      $region59: #{tpu_custom_call.1} parent=5 // pred_region
        %s1827 = ssub.s32 %s18, 2
        // Predicated region
        $region61: #{tpu_custom_call.1} parent=59 // pred_check
          %p1828 = pneg %p157
        $region62: #{tpu_custom_call.1} parent=59 // pred_check_branch
          %1830 = sbr.rel (%p1828) target = $region64
        $region63: #{tpu_custom_call.1} parent=59 // pred_region
          %s1831 = sand.u32 %s142, 1
          %s1832 = scalar_lea.sflag [#allocation4], %s1831
          %s1833 = sand.u32 %s142, 1
          %s1834 = smul.addr %s1833, 512
          %s1835 = scalar_lea.vmem [#allocation8], %s1834
          %1836 = dma.done %s1832, 8192
        $region64: #{tpu_custom_call.1} parent=59 // pred_fallthru
          _
      $region60: #{tpu_custom_call.1} parent=5 // pred_fallthru
        _
    $region6: #{tpu_custom_call.1} parent=1 // loop_footer
      %s22 = sadd.s32 1, %s18
    $region7: #{tpu_custom_call.1} parent=1 // loop_footer_branch
      %17 = sbr.rel target = $region3
    $region8: #{tpu_custom_call.1} parent=1 // loop_exit
      _
    %1837 = vsyncpa [#allocation3], 1
    %s1838 = scalar_lea.sflag [#allocation3], 1
    %1839 = vsyncpa %s1838, 1
    %1840 = vsyncpa [#allocation6], 1
    %1841 = vsyncpa [#allocation4], 1
    %s1842 = scalar_lea.sflag [#allocation4], 1
    %1843 = vsyncpa %s1842, 1

</llo_original>
